<compile_context>
chip_gen: v5e
topology: v5e:2x2
jax: 0.10.0
libtpu: 0.0.40
codegen_flags: <defaults>
</compile_context>

<pallas_src>
import functools
import math

import jax
import jax.numpy as jnp
from jax.experimental import pallas as pl
from jax.experimental.pallas import tpu as pltpu

# ----------------------------- config (small, consistent with the module) ----
VOCAB = 1000        # vocab_size (scaled down from 30522)
VOCAB_PAD = 1024    # lm_head / embedding table padded once at init (lane align)
D_MODEL = 64        # d_model   (scaled down from 512)
NHEAD = 4           # nhead     (scaled down from 8)
HEAD_DIM = D_MODEL // NHEAD
NUM_LAYERS = 2      # num_layers (scaled down from 6)
DIM_FF = 128        # dim_feedforward (scaled down from 2048)
MAX_LEN = 64        # max_len   (scaled down from 512)
LN_EPS = 1e-5
QKV_PAD = 128       # each of q/k/v occupies its own 128-lane slot in wqkv


# ----------------------------- helpers ---------------------------------------
def _layer_norm(y, gamma, beta):
    mean = jnp.mean(y, axis=-1, keepdims=True)
    var = jnp.mean(jnp.square(y - mean), axis=-1, keepdims=True)
    return (y - mean) * jax.lax.rsqrt(var + LN_EPS) * gamma + beta


# ----------------------------- fully fused forward kernel --------------------
def _bert_forward_kernel(ids_ref, emb_ref, pos_ref, head_sum_ref,
                         wqkv_ref, bqkv_ref, wout_ref, bout_ref,
                         w1_ref, b1_ref, w2_ref, b2_ref,
                         ln1_g_ref, ln1_b_ref, ln2_g_ref, ln2_b_ref,
                         lm_w_ref, lm_b_ref, o_ref, *, batch, seq):
    """Embeddings + both encoder layers + lm_head, all VMEM-resident."""
    f32 = jnp.float32
    bs = batch * seq

    # --- token embedding as an exact one-hot matmul (padding rows are zero
    #     and never selected), plus positional embedding add. ------------------
    ids = ids_ref[...]                                              # (BS,1) i32
    onehot = (ids == jax.lax.broadcasted_iota(jnp.int32, (bs, VOCAB_PAD), 1)
              ).astype(f32)                                         # (BS,Vp)
    tok = jnp.dot(onehot, emb_ref[...], preferred_element_type=f32)  # (BS,D)
    pos_s = pos_ref[0:seq, :]                                       # (S,D)
    x = tok + jnp.concatenate([pos_s] * batch, axis=0)              # (BS,D)

    head_sum = head_sum_ref[...]                                    # (D,D) const

    for l in range(NUM_LAYERS):
        # --- fused QKV projection (scale folded into the Q slot). -----------
        qkv = jnp.dot(x, wqkv_ref[l], preferred_element_type=f32) + bqkv_ref[l]
        q = qkv[:, 0:D_MODEL]
        k = qkv[:, QKV_PAD:QKV_PAD + D_MODEL]
        v = qkv[:, 2 * QKV_PAD:2 * QKV_PAD + D_MODEL]

        # --- all-head attention over axis 0 (rows sharing s, varying b). ----
        # pltpu.roll by c*seq pairs query row (b,s) with key/value at
        # ((b-c) mod B, s); across c the covered key set per row is identical
        # to the reference and the softmax-weighted sum is order invariant.
        scores, vals = [], []
        for c in range(batch):
            if c == 0:
                k_c, v_c = k, v
            else:
                k_c = pltpu.roll(k, shift=c * seq, axis=0)
                v_c = pltpu.roll(v, shift=c * seq, axis=0)
            scores.append(jnp.dot(q * k_c, head_sum,
                                  preferred_element_type=f32))
            vals.append(v_c)
        m = functools.reduce(jnp.maximum, scores)
        exps = [jnp.exp(s - m) for s in scores]
        denom = functools.reduce(lambda a, b: a + b, exps)
        inv = pl.reciprocal(denom, approx=True)                     # EUP slot
        attn = functools.reduce(
            lambda a, b: a + b, [e * vc for e, vc in zip(exps, vals)]) * inv

        # --- out-proj + residual + LN1. --------------------------------------
        o = jnp.dot(attn, wout_ref[l], preferred_element_type=f32) + bout_ref[l]
        y1 = _layer_norm(x + o, ln1_g_ref[l], ln1_b_ref[l])

        # --- FFN (ReLU) + residual + LN2. ------------------------------------
        h = jnp.maximum(
            jnp.dot(y1, w1_ref[l], preferred_element_type=f32) + b1_ref[l], 0.0)
        ff = jnp.dot(h, w2_ref[l], preferred_element_type=f32) + b2_ref[l]
        x = _layer_norm(y1 + ff, ln2_g_ref[l], ln2_b_ref[l])

    # --- lm_head: one lane-dense (BS,64)x(64,1024) matmul + store. -----------
    logits = jnp.dot(x, lm_w_ref[...], preferred_element_type=f32) + lm_b_ref[...]
    o_ref[...] = logits.astype(o_ref.dtype)


# ----------------------------- full model ------------------------------------
def bert_mini_forward(params, input_ids):
    B, S = input_ids.shape
    ids = input_ids.reshape(B * S, 1).astype(jnp.int32)
    logits = pl.pallas_call(
        functools.partial(_bert_forward_kernel, batch=B, seq=S),
        out_shape=jax.ShapeDtypeStruct((B * S, VOCAB_PAD), jnp.float32),
    )(ids, params["token_embed"], params["pos_embed"], params["head_sum"],
      params["wqkv"], params["bqkv"], params["wout"], params["bout"],
      params["w1"], params["b1"], params["w2"], params["b2"],
      params["ln1_g"], params["ln1_b"], params["ln2_g"], params["ln2_b"],
      params["lm_w"], params["lm_b"])
    return logits[:, :VOCAB].reshape(B, S, VOCAB)   # strip lane padding once


# ----------------------------- deterministic parameter init ------------------
def init_params(key):
    keys = jax.random.split(key, 3 + NUM_LAYERS)

    def w(k, shape, scale=0.02):
        return (scale * jax.random.normal(k, shape)).astype(jnp.float32)

    # token-embedding table padded to 1024 rows (pad rows are never selected).
    token_embed = jnp.zeros((VOCAB_PAD, D_MODEL), jnp.float32)
    token_embed = token_embed.at[:VOCAB].set(w(keys[0], (VOCAB, D_MODEL)))

    # lm_head weights pre-padded to VOCAB_PAD columns.
    lm_w = jnp.zeros((D_MODEL, VOCAB_PAD), jnp.float32)
    lm_w = lm_w.at[:, :VOCAB].set(w(keys[2], (D_MODEL, VOCAB)))

    # block-diagonal "head-sum" matrix, built once, reused by both layers.
    row_h = jnp.arange(D_MODEL)[:, None] // HEAD_DIM
    col_h = jnp.arange(D_MODEL)[None, :] // HEAD_DIM
    head_sum = (row_h == col_h).astype(jnp.float32)

    attn_scale = 1.0 / math.sqrt(HEAD_DIM)
    names = ("wqkv", "bqkv", "wout", "bout", "w1", "b1", "w2", "b2",
             "ln1_g", "ln1_b", "ln2_g", "ln2_b")
    stacks = {n: [] for n in names}
    for i in range(NUM_LAYERS):
        lk = jax.random.split(keys[3 + i], 6)
        wq = w(lk[0], (D_MODEL, D_MODEL)) * attn_scale   # scale folded into Q
        wk = w(lk[1], (D_MODEL, D_MODEL))
        wv = w(lk[2], (D_MODEL, D_MODEL))
        wqkv = jnp.zeros((D_MODEL, 3 * QKV_PAD), jnp.float32)
        wqkv = wqkv.at[:, 0:D_MODEL].set(wq)
        wqkv = wqkv.at[:, QKV_PAD:QKV_PAD + D_MODEL].set(wk)
        wqkv = wqkv.at[:, 2 * QKV_PAD:2 * QKV_PAD + D_MODEL].set(wv)
        stacks["wqkv"].append(wqkv)
        stacks["bqkv"].append(jnp.zeros((1, 3 * QKV_PAD), jnp.float32))
        stacks["wout"].append(w(lk[3], (D_MODEL, D_MODEL)))
        stacks["bout"].append(jnp.zeros((1, D_MODEL), jnp.float32))
        stacks["w1"].append(w(lk[4], (D_MODEL, DIM_FF)))
        stacks["b1"].append(jnp.zeros((1, DIM_FF), jnp.float32))
        stacks["w2"].append(w(lk[5], (DIM_FF, D_MODEL)))
        stacks["b2"].append(jnp.zeros((1, D_MODEL), jnp.float32))
        stacks["ln1_g"].append(jnp.ones((1, D_MODEL), jnp.float32))
        stacks["ln1_b"].append(jnp.zeros((1, D_MODEL), jnp.float32))
        stacks["ln2_g"].append(jnp.ones((1, D_MODEL), jnp.float32))
        stacks["ln2_b"].append(jnp.zeros((1, D_MODEL), jnp.float32))

    params = {
        "token_embed": token_embed,
        "pos_embed": w(keys[1], (MAX_LEN, D_MODEL)),
        "head_sum": head_sum,
        "lm_w": lm_w,
        "lm_b": jnp.zeros((1, VOCAB_PAD), jnp.float32),
    }
    params.update({n: jnp.stack(v, axis=0) for n, v in stacks.items()})
    return params


if __name__ == "__main__":
    key = jax.random.PRNGKey(0)
    pkey, ikey = jax.random.split(key)
    params = init_params(pkey)
    input_ids = jax.random.randint(ikey, (2, 8), 0, VOCAB, dtype=jnp.int32)

    logits = jax.jit(bert_mini_forward)(params, input_ids)
    jax.block_until_ready(logits)
    assert logits.shape == (2, 8, VOCAB) and logits.dtype == jnp.float32
    print("KERNEL_OK")
</pallas_src>

<mosaic_0001>
module attributes {stable_mosaic.version = 11 : i64} {
  func.func @_bert_forward_kernel(%arg0: memref<16x1xi32, #tpu.memory_space<vmem>>, %arg1: memref<1024x64xf32, #tpu.memory_space<vmem>>, %arg2: memref<64x64xf32, #tpu.memory_space<vmem>>, %arg3: memref<64x64xf32, #tpu.memory_space<vmem>>, %arg4: memref<2x64x384xf32, #tpu.memory_space<vmem>>, %arg5: memref<2x1x384xf32, #tpu.memory_space<vmem>>, %arg6: memref<2x64x64xf32, #tpu.memory_space<vmem>>, %arg7: memref<2x1x64xf32, #tpu.memory_space<vmem>>, %arg8: memref<2x64x128xf32, #tpu.memory_space<vmem>>, %arg9: memref<2x1x128xf32, #tpu.memory_space<vmem>>, %arg10: memref<2x128x64xf32, #tpu.memory_space<vmem>>, %arg11: memref<2x1x64xf32, #tpu.memory_space<vmem>>, %arg12: memref<2x1x64xf32, #tpu.memory_space<vmem>>, %arg13: memref<2x1x64xf32, #tpu.memory_space<vmem>>, %arg14: memref<2x1x64xf32, #tpu.memory_space<vmem>>, %arg15: memref<2x1x64xf32, #tpu.memory_space<vmem>>, %arg16: memref<64x1024xf32, #tpu.memory_space<vmem>>, %arg17: memref<1x1024xf32, #tpu.memory_space<vmem>>, %arg18: memref<16x1024xf32, #tpu.memory_space<vmem>>) attributes {dimension_semantics = [], scalar_prefetch = 0 : i64, scratch_operands = 0 : i64, tpu.core_type = #tpu.core_type<tc>} {
    %c0 = arith.constant 0 : index
    %c0_0 = arith.constant 0 : index
    %0 = vector.load %arg0[%c0, %c0_0] : memref<16x1xi32, #tpu.memory_space<vmem>>, vector<16x1xi32>
    %1 = tpu.iota {dimensions = array<i32: 1>} : vector<16x1024xi32>
    %2 = vector.broadcast %0 : vector<16x1xi32> to vector<16x1024xi32>
    %3 = arith.cmpi eq, %2, %1 : vector<16x1024xi32>
    %4 = arith.extui %3 : vector<16x1024xi1> to vector<16x1024xi32>
    %5 = arith.sitofp %4 : vector<16x1024xi32> to vector<16x1024xf32>
    %c0_1 = arith.constant 0 : index
    %c0_2 = arith.constant 0 : index
    %6 = vector.load %arg1[%c0_1, %c0_2] : memref<1024x64xf32, #tpu.memory_space<vmem>>, vector<1024x64xf32>
    %cst = arith.constant dense<0.000000e+00> : vector<16x64xf32>
    %7 = tpu.matmul %5, %6, %cst {dimension_numbers = #tpu.dot_dimension_numbers<[1], [0], [0], [1], [0, 0, 1, 1], [], []>} : vector<16x1024xf32>, vector<1024x64xf32>, vector<16x64xf32> -> vector<16x64xf32>
    %c0_3 = arith.constant 0 : index
    %c0_4 = arith.constant 0 : index
    %8 = vector.load %arg2[%c0_3, %c0_4] : memref<64x64xf32, #tpu.memory_space<vmem>>, vector<8x64xf32>
    %9 = tpu.concatenate %8, %8 in 0 : vector<8x64xf32>, vector<8x64xf32> -> vector<16x64xf32>
    %10 = arith.addf %7, %9 : vector<16x64xf32>
    %c0_5 = arith.constant 0 : index
    %c0_6 = arith.constant 0 : index
    %11 = vector.load %arg3[%c0_5, %c0_6] : memref<64x64xf32, #tpu.memory_space<vmem>>, vector<64x64xf32>
    %c0_7 = arith.constant 0 : index
    %c0_8 = arith.constant 0 : index
    %c0_9 = arith.constant 0 : index
    %12 = vector.load %arg4[%c0_7, %c0_8, %c0_9] : memref<2x64x384xf32, #tpu.memory_space<vmem>>, vector<1x64x384xf32>
    %13 = vector.shape_cast %12 : vector<1x64x384xf32> to vector<64x384xf32>
    %cst_10 = arith.constant dense<0.000000e+00> : vector<16x384xf32>
    %14 = tpu.matmul %10, %13, %cst_10 {dimension_numbers = #tpu.dot_dimension_numbers<[1], [0], [0], [1], [0, 0, 1, 1], [], []>} : vector<16x64xf32>, vector<64x384xf32>, vector<16x384xf32> -> vector<16x384xf32>
    %c0_11 = arith.constant 0 : index
    %c0_12 = arith.constant 0 : index
    %c0_13 = arith.constant 0 : index
    %15 = vector.load %arg5[%c0_11, %c0_12, %c0_13] : memref<2x1x384xf32, #tpu.memory_space<vmem>>, vector<1x1x384xf32>
    %16 = vector.shape_cast %15 : vector<1x1x384xf32> to vector<1x384xf32>
    %17 = vector.broadcast %16 : vector<1x384xf32> to vector<16x384xf32>
    %18 = arith.addf %14, %17 : vector<16x384xf32>
    %19 = vector.extract_strided_slice %18 {offsets = [0, 0], sizes = [16, 64], strides = [1, 1]} : vector<16x384xf32> to vector<16x64xf32>
    %20 = vector.extract_strided_slice %18 {offsets = [0, 128], sizes = [16, 64], strides = [1, 1]} : vector<16x384xf32> to vector<16x64xf32>
    %21 = vector.extract_strided_slice %18 {offsets = [0, 256], sizes = [16, 64], strides = [1, 1]} : vector<16x384xf32> to vector<16x64xf32>
    %22 = arith.mulf %19, %20 : vector<16x64xf32>
    %cst_14 = arith.constant dense<0.000000e+00> : vector<16x64xf32>
    %23 = tpu.matmul %22, %11, %cst_14 {dimension_numbers = #tpu.dot_dimension_numbers<[1], [0], [0], [1], [0, 0, 1, 1], [], []>} : vector<16x64xf32>, vector<64x64xf32>, vector<16x64xf32> -> vector<16x64xf32>
    %c8_i32 = arith.constant 8 : i32
    %24 = tpu.dynamic_rotate %20 by %c8_i32 dim 0 : vector<16x64xf32>, i32 -> vector<16x64xf32>
    %c8_i32_15 = arith.constant 8 : i32
    %25 = tpu.dynamic_rotate %21 by %c8_i32_15 dim 0 : vector<16x64xf32>, i32 -> vector<16x64xf32>
    %26 = arith.mulf %19, %24 : vector<16x64xf32>
    %cst_16 = arith.constant dense<0.000000e+00> : vector<16x64xf32>
    %27 = tpu.matmul %26, %11, %cst_16 {dimension_numbers = #tpu.dot_dimension_numbers<[1], [0], [0], [1], [0, 0, 1, 1], [], []>} : vector<16x64xf32>, vector<64x64xf32>, vector<16x64xf32> -> vector<16x64xf32>
    %28 = arith.maximumf %23, %27 : vector<16x64xf32>
    %29 = arith.subf %23, %28 : vector<16x64xf32>
    %30 = math.exp %29 : vector<16x64xf32>
    %31 = arith.subf %27, %28 : vector<16x64xf32>
    %32 = math.exp %31 : vector<16x64xf32>
    %33 = arith.addf %30, %32 : vector<16x64xf32>
    %34 = tpu.reciprocal %33 {approx = true} : vector<16x64xf32> -> vector<16x64xf32>
    %35 = arith.mulf %30, %21 : vector<16x64xf32>
    %36 = arith.mulf %32, %25 : vector<16x64xf32>
    %37 = arith.addf %35, %36 : vector<16x64xf32>
    %38 = arith.mulf %37, %34 : vector<16x64xf32>
    %c0_17 = arith.constant 0 : index
    %c0_18 = arith.constant 0 : index
    %c0_19 = arith.constant 0 : index
    %39 = vector.load %arg6[%c0_17, %c0_18, %c0_19] : memref<2x64x64xf32, #tpu.memory_space<vmem>>, vector<1x64x64xf32>
    %40 = vector.shape_cast %39 : vector<1x64x64xf32> to vector<64x64xf32>
    %cst_20 = arith.constant dense<0.000000e+00> : vector<16x64xf32>
    %41 = tpu.matmul %38, %40, %cst_20 {dimension_numbers = #tpu.dot_dimension_numbers<[1], [0], [0], [1], [0, 0, 1, 1], [], []>} : vector<16x64xf32>, vector<64x64xf32>, vector<16x64xf32> -> vector<16x64xf32>
    %c0_21 = arith.constant 0 : index
    %c0_22 = arith.constant 0 : index
    %c0_23 = arith.constant 0 : index
    %42 = vector.load %arg7[%c0_21, %c0_22, %c0_23] : memref<2x1x64xf32, #tpu.memory_space<vmem>>, vector<1x1x64xf32>
    %43 = vector.shape_cast %42 : vector<1x1x64xf32> to vector<1x64xf32>
    %44 = vector.broadcast %43 : vector<1x64xf32> to vector<16x64xf32>
    %45 = arith.addf %41, %44 : vector<16x64xf32>
    %46 = arith.addf %10, %45 : vector<16x64xf32>
    %c0_24 = arith.constant 0 : index
    %c0_25 = arith.constant 0 : index
    %c0_26 = arith.constant 0 : index
    %47 = vector.load %arg12[%c0_24, %c0_25, %c0_26] : memref<2x1x64xf32, #tpu.memory_space<vmem>>, vector<1x1x64xf32>
    %48 = vector.shape_cast %47 : vector<1x1x64xf32> to vector<1x64xf32>
    %c0_27 = arith.constant 0 : index
    %c0_28 = arith.constant 0 : index
    %c0_29 = arith.constant 0 : index
    %49 = vector.load %arg13[%c0_27, %c0_28, %c0_29] : memref<2x1x64xf32, #tpu.memory_space<vmem>>, vector<1x1x64xf32>
    %50 = vector.shape_cast %49 : vector<1x1x64xf32> to vector<1x64xf32>
    %cst_30 = arith.constant dense<0.000000e+00> : vector<16xf32>
    %51 = vector.multi_reduction <add>, %46, %cst_30 [1] : vector<16x64xf32> to vector<16xf32>
    %52 = vector.shape_cast %51 : vector<16xf32> to vector<16x1xf32>
    %cst_31 = arith.constant 6.400000e+01 : f32
    %53 = vector.broadcast %cst_31 : f32 to vector<16x1xf32>
    %54 = arith.divf %52, %53 : vector<16x1xf32>
    %55 = vector.broadcast %54 : vector<16x1xf32> to vector<16x64xf32>
    %56 = arith.subf %46, %55 : vector<16x64xf32>
    %57 = arith.mulf %56, %56 : vector<16x64xf32>
    %cst_32 = arith.constant dense<0.000000e+00> : vector<16xf32>
    %58 = vector.multi_reduction <add>, %57, %cst_32 [1] : vector<16x64xf32> to vector<16xf32>
    %59 = vector.shape_cast %58 : vector<16xf32> to vector<16x1xf32>
    %cst_33 = arith.constant 6.400000e+01 : f32
    %60 = vector.broadcast %cst_33 : f32 to vector<16x1xf32>
    %61 = arith.divf %59, %60 : vector<16x1xf32>
    %62 = vector.broadcast %54 : vector<16x1xf32> to vector<16x64xf32>
    %63 = arith.subf %46, %62 : vector<16x64xf32>
    %cst_34 = arith.constant 9.99999974E-6 : f32
    %64 = vector.broadcast %cst_34 : f32 to vector<16x1xf32>
    %65 = arith.addf %61, %64 : vector<16x1xf32>
    %66 = math.rsqrt %65 : vector<16x1xf32>
    %67 = vector.broadcast %66 : vector<16x1xf32> to vector<16x64xf32>
    %68 = arith.mulf %63, %67 : vector<16x64xf32>
    %69 = vector.broadcast %48 : vector<1x64xf32> to vector<16x64xf32>
    %70 = arith.mulf %68, %69 : vector<16x64xf32>
    %71 = vector.broadcast %50 : vector<1x64xf32> to vector<16x64xf32>
    %72 = arith.addf %70, %71 : vector<16x64xf32>
    %c0_35 = arith.constant 0 : index
    %c0_36 = arith.constant 0 : index
    %c0_37 = arith.constant 0 : index
    %73 = vector.load %arg8[%c0_35, %c0_36, %c0_37] : memref<2x64x128xf32, #tpu.memory_space<vmem>>, vector<1x64x128xf32>
    %74 = vector.shape_cast %73 : vector<1x64x128xf32> to vector<64x128xf32>
    %cst_38 = arith.constant dense<0.000000e+00> : vector<16x128xf32>
    %75 = tpu.matmul %72, %74, %cst_38 {dimension_numbers = #tpu.dot_dimension_numbers<[1], [0], [0], [1], [0, 0, 1, 1], [], []>} : vector<16x64xf32>, vector<64x128xf32>, vector<16x128xf32> -> vector<16x128xf32>
    %c0_39 = arith.constant 0 : index
    %c0_40 = arith.constant 0 : index
    %c0_41 = arith.constant 0 : index
    %76 = vector.load %arg9[%c0_39, %c0_40, %c0_41] : memref<2x1x128xf32, #tpu.memory_space<vmem>>, vector<1x1x128xf32>
    %77 = vector.shape_cast %76 : vector<1x1x128xf32> to vector<1x128xf32>
    %78 = vector.broadcast %77 : vector<1x128xf32> to vector<16x128xf32>
    %79 = arith.addf %75, %78 : vector<16x128xf32>
    %cst_42 = arith.constant 0.000000e+00 : f32
    %80 = vector.broadcast %cst_42 : f32 to vector<16x128xf32>
    %81 = arith.maximumf %79, %80 : vector<16x128xf32>
    %c0_43 = arith.constant 0 : index
    %c0_44 = arith.constant 0 : index
    %c0_45 = arith.constant 0 : index
    %82 = vector.load %arg10[%c0_43, %c0_44, %c0_45] : memref<2x128x64xf32, #tpu.memory_space<vmem>>, vector<1x128x64xf32>
    %83 = vector.shape_cast %82 : vector<1x128x64xf32> to vector<128x64xf32>
    %cst_46 = arith.constant dense<0.000000e+00> : vector<16x64xf32>
    %84 = tpu.matmul %81, %83, %cst_46 {dimension_numbers = #tpu.dot_dimension_numbers<[1], [0], [0], [1], [0, 0, 1, 1], [], []>} : vector<16x128xf32>, vector<128x64xf32>, vector<16x64xf32> -> vector<16x64xf32>
    %c0_47 = arith.constant 0 : index
    %c0_48 = arith.constant 0 : index
    %c0_49 = arith.constant 0 : index
    %85 = vector.load %arg11[%c0_47, %c0_48, %c0_49] : memref<2x1x64xf32, #tpu.memory_space<vmem>>, vector<1x1x64xf32>
    %86 = vector.shape_cast %85 : vector<1x1x64xf32> to vector<1x64xf32>
    %87 = vector.broadcast %86 : vector<1x64xf32> to vector<16x64xf32>
    %88 = arith.addf %84, %87 : vector<16x64xf32>
    %89 = arith.addf %72, %88 : vector<16x64xf32>
    %c0_50 = arith.constant 0 : index
    %c0_51 = arith.constant 0 : index
    %c0_52 = arith.constant 0 : index
    %90 = vector.load %arg14[%c0_50, %c0_51, %c0_52] : memref<2x1x64xf32, #tpu.memory_space<vmem>>, vector<1x1x64xf32>
    %91 = vector.shape_cast %90 : vector<1x1x64xf32> to vector<1x64xf32>
    %c0_53 = arith.constant 0 : index
    %c0_54 = arith.constant 0 : index
    %c0_55 = arith.constant 0 : index
    %92 = vector.load %arg15[%c0_53, %c0_54, %c0_55] : memref<2x1x64xf32, #tpu.memory_space<vmem>>, vector<1x1x64xf32>
    %93 = vector.shape_cast %92 : vector<1x1x64xf32> to vector<1x64xf32>
    %cst_56 = arith.constant dense<0.000000e+00> : vector<16xf32>
    %94 = vector.multi_reduction <add>, %89, %cst_56 [1] : vector<16x64xf32> to vector<16xf32>
    %95 = vector.shape_cast %94 : vector<16xf32> to vector<16x1xf32>
    %cst_57 = arith.constant 6.400000e+01 : f32
    %96 = vector.broadcast %cst_57 : f32 to vector<16x1xf32>
    %97 = arith.divf %95, %96 : vector<16x1xf32>
    %98 = vector.broadcast %97 : vector<16x1xf32> to vector<16x64xf32>
    %99 = arith.subf %89, %98 : vector<16x64xf32>
    %100 = arith.mulf %99, %99 : vector<16x64xf32>
    %cst_58 = arith.constant dense<0.000000e+00> : vector<16xf32>
    %101 = vector.multi_reduction <add>, %100, %cst_58 [1] : vector<16x64xf32> to vector<16xf32>
    %102 = vector.shape_cast %101 : vector<16xf32> to vector<16x1xf32>
    %cst_59 = arith.constant 6.400000e+01 : f32
    %103 = vector.broadcast %cst_59 : f32 to vector<16x1xf32>
    %104 = arith.divf %102, %103 : vector<16x1xf32>
    %105 = vector.broadcast %97 : vector<16x1xf32> to vector<16x64xf32>
    %106 = arith.subf %89, %105 : vector<16x64xf32>
    %cst_60 = arith.constant 9.99999974E-6 : f32
    %107 = vector.broadcast %cst_60 : f32 to vector<16x1xf32>
    %108 = arith.addf %104, %107 : vector<16x1xf32>
    %109 = math.rsqrt %108 : vector<16x1xf32>
    %110 = vector.broadcast %109 : vector<16x1xf32> to vector<16x64xf32>
    %111 = arith.mulf %106, %110 : vector<16x64xf32>
    %112 = vector.broadcast %91 : vector<1x64xf32> to vector<16x64xf32>
    %113 = arith.mulf %111, %112 : vector<16x64xf32>
    %114 = vector.broadcast %93 : vector<1x64xf32> to vector<16x64xf32>
    %115 = arith.addf %113, %114 : vector<16x64xf32>
    %c1 = arith.constant 1 : index
    %c0_61 = arith.constant 0 : index
    %c0_62 = arith.constant 0 : index
    %116 = vector.load %arg4[%c1, %c0_61, %c0_62] : memref<2x64x384xf32, #tpu.memory_space<vmem>>, vector<1x64x384xf32>
    %117 = vector.shape_cast %116 : vector<1x64x384xf32> to vector<64x384xf32>
    %cst_63 = arith.constant dense<0.000000e+00> : vector<16x384xf32>
    %118 = tpu.matmul %115, %117, %cst_63 {dimension_numbers = #tpu.dot_dimension_numbers<[1], [0], [0], [1], [0, 0, 1, 1], [], []>} : vector<16x64xf32>, vector<64x384xf32>, vector<16x384xf32> -> vector<16x384xf32>
    %c1_64 = arith.constant 1 : index
    %c0_65 = arith.constant 0 : index
    %c0_66 = arith.constant 0 : index
    %119 = vector.load %arg5[%c1_64, %c0_65, %c0_66] : memref<2x1x384xf32, #tpu.memory_space<vmem>>, vector<1x1x384xf32>
    %120 = vector.shape_cast %119 : vector<1x1x384xf32> to vector<1x384xf32>
    %121 = vector.broadcast %120 : vector<1x384xf32> to vector<16x384xf32>
    %122 = arith.addf %118, %121 : vector<16x384xf32>
    %123 = vector.extract_strided_slice %122 {offsets = [0, 0], sizes = [16, 64], strides = [1, 1]} : vector<16x384xf32> to vector<16x64xf32>
    %124 = vector.extract_strided_slice %122 {offsets = [0, 128], sizes = [16, 64], strides = [1, 1]} : vector<16x384xf32> to vector<16x64xf32>
    %125 = vector.extract_strided_slice %122 {offsets = [0, 256], sizes = [16, 64], strides = [1, 1]} : vector<16x384xf32> to vector<16x64xf32>
    %126 = arith.mulf %123, %124 : vector<16x64xf32>
    %cst_67 = arith.constant dense<0.000000e+00> : vector<16x64xf32>
    %127 = tpu.matmul %126, %11, %cst_67 {dimension_numbers = #tpu.dot_dimension_numbers<[1], [0], [0], [1], [0, 0, 1, 1], [], []>} : vector<16x64xf32>, vector<64x64xf32>, vector<16x64xf32> -> vector<16x64xf32>
    %c8_i32_68 = arith.constant 8 : i32
    %128 = tpu.dynamic_rotate %124 by %c8_i32_68 dim 0 : vector<16x64xf32>, i32 -> vector<16x64xf32>
    %c8_i32_69 = arith.constant 8 : i32
    %129 = tpu.dynamic_rotate %125 by %c8_i32_69 dim 0 : vector<16x64xf32>, i32 -> vector<16x64xf32>
    %130 = arith.mulf %123, %128 : vector<16x64xf32>
    %cst_70 = arith.constant dense<0.000000e+00> : vector<16x64xf32>
    %131 = tpu.matmul %130, %11, %cst_70 {dimension_numbers = #tpu.dot_dimension_numbers<[1], [0], [0], [1], [0, 0, 1, 1], [], []>} : vector<16x64xf32>, vector<64x64xf32>, vector<16x64xf32> -> vector<16x64xf32>
    %132 = arith.maximumf %127, %131 : vector<16x64xf32>
    %133 = arith.subf %127, %132 : vector<16x64xf32>
    %134 = math.exp %133 : vector<16x64xf32>
    %135 = arith.subf %131, %132 : vector<16x64xf32>
    %136 = math.exp %135 : vector<16x64xf32>
    %137 = arith.addf %134, %136 : vector<16x64xf32>
    %138 = tpu.reciprocal %137 {approx = true} : vector<16x64xf32> -> vector<16x64xf32>
    %139 = arith.mulf %134, %125 : vector<16x64xf32>
    %140 = arith.mulf %136, %129 : vector<16x64xf32>
    %141 = arith.addf %139, %140 : vector<16x64xf32>
    %142 = arith.mulf %141, %138 : vector<16x64xf32>
    %c1_71 = arith.constant 1 : index
    %c0_72 = arith.constant 0 : index
    %c0_73 = arith.constant 0 : index
    %143 = vector.load %arg6[%c1_71, %c0_72, %c0_73] : memref<2x64x64xf32, #tpu.memory_space<vmem>>, vector<1x64x64xf32>
    %144 = vector.shape_cast %143 : vector<1x64x64xf32> to vector<64x64xf32>
    %cst_74 = arith.constant dense<0.000000e+00> : vector<16x64xf32>
    %145 = tpu.matmul %142, %144, %cst_74 {dimension_numbers = #tpu.dot_dimension_numbers<[1], [0], [0], [1], [0, 0, 1, 1], [], []>} : vector<16x64xf32>, vector<64x64xf32>, vector<16x64xf32> -> vector<16x64xf32>
    %c1_75 = arith.constant 1 : index
    %c0_76 = arith.constant 0 : index
    %c0_77 = arith.constant 0 : index
    %146 = vector.load %arg7[%c1_75, %c0_76, %c0_77] : memref<2x1x64xf32, #tpu.memory_space<vmem>>, vector<1x1x64xf32>
    %147 = vector.shape_cast %146 : vector<1x1x64xf32> to vector<1x64xf32>
    %148 = vector.broadcast %147 : vector<1x64xf32> to vector<16x64xf32>
    %149 = arith.addf %145, %148 : vector<16x64xf32>
    %150 = arith.addf %115, %149 : vector<16x64xf32>
    %c1_78 = arith.constant 1 : index
    %c0_79 = arith.constant 0 : index
    %c0_80 = arith.constant 0 : index
    %151 = vector.load %arg12[%c1_78, %c0_79, %c0_80] : memref<2x1x64xf32, #tpu.memory_space<vmem>>, vector<1x1x64xf32>
    %152 = vector.shape_cast %151 : vector<1x1x64xf32> to vector<1x64xf32>
    %c1_81 = arith.constant 1 : index
    %c0_82 = arith.constant 0 : index
    %c0_83 = arith.constant 0 : index
    %153 = vector.load %arg13[%c1_81, %c0_82, %c0_83] : memref<2x1x64xf32, #tpu.memory_space<vmem>>, vector<1x1x64xf32>
    %154 = vector.shape_cast %153 : vector<1x1x64xf32> to vector<1x64xf32>
    %cst_84 = arith.constant dense<0.000000e+00> : vector<16xf32>
    %155 = vector.multi_reduction <add>, %150, %cst_84 [1] : vector<16x64xf32> to vector<16xf32>
    %156 = vector.shape_cast %155 : vector<16xf32> to vector<16x1xf32>
    %cst_85 = arith.constant 6.400000e+01 : f32
    %157 = vector.broadcast %cst_85 : f32 to vector<16x1xf32>
    %158 = arith.divf %156, %157 : vector<16x1xf32>
    %159 = vector.broadcast %158 : vector<16x1xf32> to vector<16x64xf32>
    %160 = arith.subf %150, %159 : vector<16x64xf32>
    %161 = arith.mulf %160, %160 : vector<16x64xf32>
    %cst_86 = arith.constant dense<0.000000e+00> : vector<16xf32>
    %162 = vector.multi_reduction <add>, %161, %cst_86 [1] : vector<16x64xf32> to vector<16xf32>
    %163 = vector.shape_cast %162 : vector<16xf32> to vector<16x1xf32>
    %cst_87 = arith.constant 6.400000e+01 : f32
    %164 = vector.broadcast %cst_87 : f32 to vector<16x1xf32>
    %165 = arith.divf %163, %164 : vector<16x1xf32>
    %166 = vector.broadcast %158 : vector<16x1xf32> to vector<16x64xf32>
    %167 = arith.subf %150, %166 : vector<16x64xf32>
    %cst_88 = arith.constant 9.99999974E-6 : f32
    %168 = vector.broadcast %cst_88 : f32 to vector<16x1xf32>
    %169 = arith.addf %165, %168 : vector<16x1xf32>
    %170 = math.rsqrt %169 : vector<16x1xf32>
    %171 = vector.broadcast %170 : vector<16x1xf32> to vector<16x64xf32>
    %172 = arith.mulf %167, %171 : vector<16x64xf32>
    %173 = vector.broadcast %152 : vector<1x64xf32> to vector<16x64xf32>
    %174 = arith.mulf %172, %173 : vector<16x64xf32>
    %175 = vector.broadcast %154 : vector<1x64xf32> to vector<16x64xf32>
    %176 = arith.addf %174, %175 : vector<16x64xf32>
    %c1_89 = arith.constant 1 : index
    %c0_90 = arith.constant 0 : index
    %c0_91 = arith.constant 0 : index
    %177 = vector.load %arg8[%c1_89, %c0_90, %c0_91] : memref<2x64x128xf32, #tpu.memory_space<vmem>>, vector<1x64x128xf32>
    %178 = vector.shape_cast %177 : vector<1x64x128xf32> to vector<64x128xf32>
    %cst_92 = arith.constant dense<0.000000e+00> : vector<16x128xf32>
    %179 = tpu.matmul %176, %178, %cst_92 {dimension_numbers = #tpu.dot_dimension_numbers<[1], [0], [0], [1], [0, 0, 1, 1], [], []>} : vector<16x64xf32>, vector<64x128xf32>, vector<16x128xf32> -> vector<16x128xf32>
    %c1_93 = arith.constant 1 : index
    %c0_94 = arith.constant 0 : index
    %c0_95 = arith.constant 0 : index
    %180 = vector.load %arg9[%c1_93, %c0_94, %c0_95] : memref<2x1x128xf32, #tpu.memory_space<vmem>>, vector<1x1x128xf32>
    %181 = vector.shape_cast %180 : vector<1x1x128xf32> to vector<1x128xf32>
    %182 = vector.broadcast %181 : vector<1x128xf32> to vector<16x128xf32>
    %183 = arith.addf %179, %182 : vector<16x128xf32>
    %cst_96 = arith.constant 0.000000e+00 : f32
    %184 = vector.broadcast %cst_96 : f32 to vector<16x128xf32>
    %185 = arith.maximumf %183, %184 : vector<16x128xf32>
    %c1_97 = arith.constant 1 : index
    %c0_98 = arith.constant 0 : index
    %c0_99 = arith.constant 0 : index
    %186 = vector.load %arg10[%c1_97, %c0_98, %c0_99] : memref<2x128x64xf32, #tpu.memory_space<vmem>>, vector<1x128x64xf32>
    %187 = vector.shape_cast %186 : vector<1x128x64xf32> to vector<128x64xf32>
    %cst_100 = arith.constant dense<0.000000e+00> : vector<16x64xf32>
    %188 = tpu.matmul %185, %187, %cst_100 {dimension_numbers = #tpu.dot_dimension_numbers<[1], [0], [0], [1], [0, 0, 1, 1], [], []>} : vector<16x128xf32>, vector<128x64xf32>, vector<16x64xf32> -> vector<16x64xf32>
    %c1_101 = arith.constant 1 : index
    %c0_102 = arith.constant 0 : index
    %c0_103 = arith.constant 0 : index
    %189 = vector.load %arg11[%c1_101, %c0_102, %c0_103] : memref<2x1x64xf32, #tpu.memory_space<vmem>>, vector<1x1x64xf32>
    %190 = vector.shape_cast %189 : vector<1x1x64xf32> to vector<1x64xf32>
    %191 = vector.broadcast %190 : vector<1x64xf32> to vector<16x64xf32>
    %192 = arith.addf %188, %191 : vector<16x64xf32>
    %193 = arith.addf %176, %192 : vector<16x64xf32>
    %c1_104 = arith.constant 1 : index
    %c0_105 = arith.constant 0 : index
    %c0_106 = arith.constant 0 : index
    %194 = vector.load %arg14[%c1_104, %c0_105, %c0_106] : memref<2x1x64xf32, #tpu.memory_space<vmem>>, vector<1x1x64xf32>
    %195 = vector.shape_cast %194 : vector<1x1x64xf32> to vector<1x64xf32>
    %c1_107 = arith.constant 1 : index
    %c0_108 = arith.constant 0 : index
    %c0_109 = arith.constant 0 : index
    %196 = vector.load %arg15[%c1_107, %c0_108, %c0_109] : memref<2x1x64xf32, #tpu.memory_space<vmem>>, vector<1x1x64xf32>
    %197 = vector.shape_cast %196 : vector<1x1x64xf32> to vector<1x64xf32>
    %cst_110 = arith.constant dense<0.000000e+00> : vector<16xf32>
    %198 = vector.multi_reduction <add>, %193, %cst_110 [1] : vector<16x64xf32> to vector<16xf32>
    %199 = vector.shape_cast %198 : vector<16xf32> to vector<16x1xf32>
    %cst_111 = arith.constant 6.400000e+01 : f32
    %200 = vector.broadcast %cst_111 : f32 to vector<16x1xf32>
    %201 = arith.divf %199, %200 : vector<16x1xf32>
    %202 = vector.broadcast %201 : vector<16x1xf32> to vector<16x64xf32>
    %203 = arith.subf %193, %202 : vector<16x64xf32>
    %204 = arith.mulf %203, %203 : vector<16x64xf32>
    %cst_112 = arith.constant dense<0.000000e+00> : vector<16xf32>
    %205 = vector.multi_reduction <add>, %204, %cst_112 [1] : vector<16x64xf32> to vector<16xf32>
    %206 = vector.shape_cast %205 : vector<16xf32> to vector<16x1xf32>
    %cst_113 = arith.constant 6.400000e+01 : f32
    %207 = vector.broadcast %cst_113 : f32 to vector<16x1xf32>
    %208 = arith.divf %206, %207 : vector<16x1xf32>
    %209 = vector.broadcast %201 : vector<16x1xf32> to vector<16x64xf32>
    %210 = arith.subf %193, %209 : vector<16x64xf32>
    %cst_114 = arith.constant 9.99999974E-6 : f32
    %211 = vector.broadcast %cst_114 : f32 to vector<16x1xf32>
    %212 = arith.addf %208, %211 : vector<16x1xf32>
    %213 = math.rsqrt %212 : vector<16x1xf32>
    %214 = vector.broadcast %213 : vector<16x1xf32> to vector<16x64xf32>
    %215 = arith.mulf %210, %214 : vector<16x64xf32>
    %216 = vector.broadcast %195 : vector<1x64xf32> to vector<16x64xf32>
    %217 = arith.mulf %215, %216 : vector<16x64xf32>
    %218 = vector.broadcast %197 : vector<1x64xf32> to vector<16x64xf32>
    %219 = arith.addf %217, %218 : vector<16x64xf32>
    %c0_115 = arith.constant 0 : index
    %c0_116 = arith.constant 0 : index
    %220 = vector.load %arg16[%c0_115, %c0_116] : memref<64x1024xf32, #tpu.memory_space<vmem>>, vector<64x1024xf32>
    %cst_117 = arith.constant dense<0.000000e+00> : vector<16x1024xf32>
    %221 = tpu.matmul %219, %220, %cst_117 {dimension_numbers = #tpu.dot_dimension_numbers<[1], [0], [0], [1], [0, 0, 1, 1], [], []>} : vector<16x64xf32>, vector<64x1024xf32>, vector<16x1024xf32> -> vector<16x1024xf32>
    %c0_118 = arith.constant 0 : index
    %c0_119 = arith.constant 0 : index
    %222 = vector.load %arg17[%c0_118, %c0_119] : memref<1x1024xf32, #tpu.memory_space<vmem>>, vector<1x1024xf32>
    %223 = vector.broadcast %222 : vector<1x1024xf32> to vector<16x1024xf32>
    %224 = arith.addf %221, %223 : vector<16x1024xf32>
    %c0_120 = arith.constant 0 : index
    %c0_121 = arith.constant 0 : index
    %225 = vector.load %arg18[%c0_120, %c0_121] : memref<16x1024xf32, #tpu.memory_space<vmem>>, vector<16x1024xf32>
    tpu.vector_store %arg18[%c0_120, %c0_121], %224 {strides = array<i32>} : memref<16x1024xf32, #tpu.memory_space<vmem>>, vector<16x1024xf32>,
    return
  }
}

</mosaic_0001>

<llo_original>
// kernel: bert_mini_forward.1
$region0: #{bert_mini_forward.1}
  #allocation0 [shape = 'u32[]', space=smem, size = 0x4, offset = 0x4, fixed_abs, tag = 'smem constant byte address 0x4 - core index']
  #allocation1 [shape = 'u32[72,128]{1,0:T(1,128)}', space=vmem, size = 0x9000, scoped, tag = 'internal scratch']
  %s0 = inlined_call_operand.vmem [shape: s32[16,1], index: 0, kind: input, shape index: {}]
  %s1 = inlined_call_operand.vmem [shape: f32[1024,64], index: 1, kind: input, shape index: {}]
  %s2 = inlined_call_operand.vmem [shape: f32[64,64], index: 2, kind: input, shape index: {}]
  %s3 = inlined_call_operand.vmem [shape: f32[64,64], index: 3, kind: input, shape index: {}]
  %s4 = inlined_call_operand.vmem [shape: f32[2,64,384], index: 4, kind: input, shape index: {}]
  %s5 = inlined_call_operand.vmem [shape: f32[2,1,384], index: 5, kind: input, shape index: {}]
  %s6 = inlined_call_operand.vmem [shape: f32[2,64,64], index: 6, kind: input, shape index: {}]
  %s7 = inlined_call_operand.vmem [shape: f32[2,1,64], index: 7, kind: input, shape index: {}]
  %s8 = inlined_call_operand.vmem [shape: f32[2,64,128], index: 8, kind: input, shape index: {}]
  %s9 = inlined_call_operand.vmem [shape: f32[2,1,128], index: 9, kind: input, shape index: {}]
  %s10 = inlined_call_operand.vmem [shape: f32[2,128,64], index: 10, kind: input, shape index: {}]
  %s11 = inlined_call_operand.vmem [shape: f32[2,1,64], index: 11, kind: input, shape index: {}]
  %s12 = inlined_call_operand.vmem [shape: f32[2,1,64], index: 12, kind: input, shape index: {}]
  %s13 = inlined_call_operand.vmem [shape: f32[2,1,64], index: 13, kind: input, shape index: {}]
  %s14 = inlined_call_operand.vmem [shape: f32[2,1,64], index: 14, kind: input, shape index: {}]
  %s15 = inlined_call_operand.vmem [shape: f32[2,1,64], index: 15, kind: input, shape index: {}]
  %s16 = inlined_call_operand.vmem [shape: f32[64,1024], index: 16, kind: input, shape index: {}]
  %s17 = inlined_call_operand.vmem [shape: f32[1,1024], index: 17, kind: input, shape index: {}]
  %s18 = inlined_call_operand.vmem [shape: f32[16,1024], index: 18, kind: output, shape index: {}]
  %s19 = sld [smem:[#allocation0]]
  $region82: #{bert_mini_forward.1} parent=0
    _
  %s21 = ssub.s32 1, %s19
  %s22 = scalar_select 0, %s21, %s19
  // Predicated region
  $region2: #{bert_mini_forward.1} parent=0 // pred_check
    _
  $region3: #{bert_mini_forward.1} parent=0 // pred_check_branch
    %24 = sbr.rel (0) target = $region5
  $region4: #{bert_mini_forward.1} parent=0 // pred_region
    _
  $region5: #{bert_mini_forward.1} parent=0 // pred_fallthru
    _
  // Predicated region
  $region6: #{bert_mini_forward.1} parent=0 // pred_check
    _
  $region7: #{bert_mini_forward.1} parent=0 // pred_check_branch
    %26 = sbr.rel (0) target = $region9
  $region8: #{bert_mini_forward.1} parent=0 // pred_region
    _
  $region9: #{bert_mini_forward.1} parent=0 // pred_fallthru
    _
  // Predicated region
  $region10: #{bert_mini_forward.1} parent=0 // pred_check
    _
  $region11: #{bert_mini_forward.1} parent=0 // pred_check_branch
    %28 = sbr.rel (0) target = $region13
  $region12: #{bert_mini_forward.1} parent=0 // pred_region
    _
  $region13: #{bert_mini_forward.1} parent=0 // pred_fallthru
    _
  // Predicated region
  $region14: #{bert_mini_forward.1} parent=0 // pred_check
    _
  $region15: #{bert_mini_forward.1} parent=0 // pred_check_branch
    %30 = sbr.rel (0) target = $region17
  $region16: #{bert_mini_forward.1} parent=0 // pred_region
    _
  $region17: #{bert_mini_forward.1} parent=0 // pred_fallthru
    _
  // Predicated region
  $region18: #{bert_mini_forward.1} parent=0 // pred_check
    _
  $region19: #{bert_mini_forward.1} parent=0 // pred_check_branch
    %32 = sbr.rel (0) target = $region21
  $region20: #{bert_mini_forward.1} parent=0 // pred_region
    _
  $region21: #{bert_mini_forward.1} parent=0 // pred_fallthru
    _
  // Predicated region
  $region22: #{bert_mini_forward.1} parent=0 // pred_check
    _
  $region23: #{bert_mini_forward.1} parent=0 // pred_check_branch
    %34 = sbr.rel (0) target = $region25
  $region24: #{bert_mini_forward.1} parent=0 // pred_region
    _
  $region25: #{bert_mini_forward.1} parent=0 // pred_fallthru
    _
  // Predicated region
  $region26: #{bert_mini_forward.1} parent=0 // pred_check
    _
  $region27: #{bert_mini_forward.1} parent=0 // pred_check_branch
    %36 = sbr.rel (0) target = $region29
  $region28: #{bert_mini_forward.1} parent=0 // pred_region
    _
  $region29: #{bert_mini_forward.1} parent=0 // pred_fallthru
    _
  // Predicated region
  $region30: #{bert_mini_forward.1} parent=0 // pred_check
    _
  $region31: #{bert_mini_forward.1} parent=0 // pred_check_branch
    %38 = sbr.rel (0) target = $region33
  $region32: #{bert_mini_forward.1} parent=0 // pred_region
    _
  $region33: #{bert_mini_forward.1} parent=0 // pred_fallthru
    _
  // Predicated region
  $region34: #{bert_mini_forward.1} parent=0 // pred_check
    _
  $region35: #{bert_mini_forward.1} parent=0 // pred_check_branch
    %40 = sbr.rel (0) target = $region37
  $region36: #{bert_mini_forward.1} parent=0 // pred_region
    _
  $region37: #{bert_mini_forward.1} parent=0 // pred_fallthru
    _
  // Predicated region
  $region38: #{bert_mini_forward.1} parent=0 // pred_check
    _
  $region39: #{bert_mini_forward.1} parent=0 // pred_check_branch
    %42 = sbr.rel (0) target = $region41
  $region40: #{bert_mini_forward.1} parent=0 // pred_region
    _
  $region41: #{bert_mini_forward.1} parent=0 // pred_fallthru
    _
  // Predicated region
  $region42: #{bert_mini_forward.1} parent=0 // pred_check
    _
  $region43: #{bert_mini_forward.1} parent=0 // pred_check_branch
    %44 = sbr.rel (0) target = $region45
  $region44: #{bert_mini_forward.1} parent=0 // pred_region
    _
  $region45: #{bert_mini_forward.1} parent=0 // pred_fallthru
    _
  // Predicated region
  $region46: #{bert_mini_forward.1} parent=0 // pred_check
    _
  $region47: #{bert_mini_forward.1} parent=0 // pred_check_branch
    %46 = sbr.rel (0) target = $region49
  $region48: #{bert_mini_forward.1} parent=0 // pred_region
    _
  $region49: #{bert_mini_forward.1} parent=0 // pred_fallthru
    _
  // Predicated region
  $region50: #{bert_mini_forward.1} parent=0 // pred_check
    _
  $region51: #{bert_mini_forward.1} parent=0 // pred_check_branch
    %48 = sbr.rel (0) target = $region53
  $region52: #{bert_mini_forward.1} parent=0 // pred_region
    _
  $region53: #{bert_mini_forward.1} parent=0 // pred_fallthru
    _
  // Predicated region
  $region54: #{bert_mini_forward.1} parent=0 // pred_check
    _
  $region55: #{bert_mini_forward.1} parent=0 // pred_check_branch
    %50 = sbr.rel (0) target = $region57
  $region56: #{bert_mini_forward.1} parent=0 // pred_region
    _
  $region57: #{bert_mini_forward.1} parent=0 // pred_fallthru
    _
  // Predicated region
  $region58: #{bert_mini_forward.1} parent=0 // pred_check
    _
  $region59: #{bert_mini_forward.1} parent=0 // pred_check_branch
    %52 = sbr.rel (0) target = $region61
  $region60: #{bert_mini_forward.1} parent=0 // pred_region
    _
  $region61: #{bert_mini_forward.1} parent=0 // pred_fallthru
    _
  // Predicated region
  $region62: #{bert_mini_forward.1} parent=0 // pred_check
    _
  $region63: #{bert_mini_forward.1} parent=0 // pred_check_branch
    %54 = sbr.rel (0) target = $region65
  $region64: #{bert_mini_forward.1} parent=0 // pred_region
    _
  $region65: #{bert_mini_forward.1} parent=0 // pred_fallthru
    _
  // Predicated region
  $region66: #{bert_mini_forward.1} parent=0 // pred_check
    _
  $region67: #{bert_mini_forward.1} parent=0 // pred_check_branch
    %56 = sbr.rel (0) target = $region69
  $region68: #{bert_mini_forward.1} parent=0 // pred_region
    _
  $region69: #{bert_mini_forward.1} parent=0 // pred_fallthru
    _
  // Predicated region
  $region70: #{bert_mini_forward.1} parent=0 // pred_check
    _
  $region71: #{bert_mini_forward.1} parent=0 // pred_check_branch
    %58 = sbr.rel (0) target = $region73
  $region72: #{bert_mini_forward.1} parent=0 // pred_region
    _
  $region73: #{bert_mini_forward.1} parent=0 // pred_fallthru
    _
  %v59 = vld [vmem:[%s0] sm:$0xff]
  %v60 = vld [vmem:[%s0 + $0x8] sm:$0xff]
  %v61 = vlaneseq
  %v62 = vand.u32 %v61, 127
  %v63 = vadd.s32 %v62, 128
  %v64 = vadd.s32 %v62, 256
  %v65 = vadd.s32 %v62, 384
  %v66 = vadd.s32 %v62, 512
  %v67 = vadd.s32 %v62, 640
  %v68 = vadd.s32 %v62, 768
  %v69 = vadd.s32 %v62, 896
  %70 = vset.pattern.permute.xlu0 0
  %71 = vperm.xlu0 %70, %v59
  %v72 = vpop.permute.xlu0 %71
  %73 = vset.pattern.permute.xlu0 0
  %74 = vperm.xlu0 %73, %v60
  %v75 = vpop.permute.xlu0 %74
  %vm76 = vcmp.eq.s32.totalorder %v72, %v62
  %vm77 = vcmp.eq.s32.totalorder %v72, %v63
  %vm78 = vcmp.eq.s32.totalorder %v72, %v64
  %vm79 = vcmp.eq.s32.totalorder %v72, %v65
  %vm80 = vcmp.eq.s32.totalorder %v72, %v66
  %vm81 = vcmp.eq.s32.totalorder %v72, %v67
  %vm82 = vcmp.eq.s32.totalorder %v72, %v68
  %vm83 = vcmp.eq.s32.totalorder %v72, %v69
  %vm84 = vcmp.eq.s32.totalorder %v75, %v62
  %vm85 = vcmp.eq.s32.totalorder %v75, %v63
  %vm86 = vcmp.eq.s32.totalorder %v75, %v64
  %vm87 = vcmp.eq.s32.totalorder %v75, %v65
  %vm88 = vcmp.eq.s32.totalorder %v75, %v66
  %vm89 = vcmp.eq.s32.totalorder %v75, %v67
  %vm90 = vcmp.eq.s32.totalorder %v75, %v68
  %vm91 = vcmp.eq.s32.totalorder %v75, %v69
  %v92 = vsel %vm76, 1, 0
  %v93 = vsel %vm77, 1, 0
  %v94 = vsel %vm78, 1, 0
  %v95 = vsel %vm79, 1, 0
  %v96 = vsel %vm80, 1, 0
  %v97 = vsel %vm81, 1, 0
  %v98 = vsel %vm82, 1, 0
  %v99 = vsel %vm83, 1, 0
  %v100 = vsel %vm84, 1, 0
  %v101 = vsel %vm85, 1, 0
  %v102 = vsel %vm86, 1, 0
  %v103 = vsel %vm87, 1, 0
  %v104 = vsel %vm88, 1, 0
  %v105 = vsel %vm89, 1, 0
  %v106 = vsel %vm90, 1, 0
  %v107 = vsel %vm91, 1, 0
  %v108 = vcvt.s32.f32 %v92
  %v109 = vcvt.s32.f32 %v93
  %v110 = vcvt.s32.f32 %v94
  %v111 = vcvt.s32.f32 %v95
  %v112 = vcvt.s32.f32 %v96
  %v113 = vcvt.s32.f32 %v97
  %v114 = vcvt.s32.f32 %v98
  %v115 = vcvt.s32.f32 %v99
  %v116 = vcvt.s32.f32 %v100
  %v117 = vcvt.s32.f32 %v101
  %v118 = vcvt.s32.f32 %v102
  %v119 = vcvt.s32.f32 %v103
  %v120 = vcvt.s32.f32 %v104
  %v121 = vcvt.s32.f32 %v105
  %v122 = vcvt.s32.f32 %v106
  %v123 = vcvt.s32.f32 %v107
  %v124 = vld [vmem:[%s1] sm:$0xff]
  %v125 = vld [vmem:[%s1 + $0x8] sm:$0xff]
  %v126 = vld [vmem:[%s1 + $0x10] sm:$0xff]
  %v127 = vld [vmem:[%s1 + $0x18] sm:$0xff]
  %v128 = vld [vmem:[%s1 + $0x20] sm:$0xff]
  %v129 = vld [vmem:[%s1 + $0x28] sm:$0xff]
  %v130 = vld [vmem:[%s1 + $0x30] sm:$0xff]
  %v131 = vld [vmem:[%s1 + $0x38] sm:$0xff]
  %v132 = vld [vmem:[%s1 + $0x40] sm:$0xff]
  %v133 = vld [vmem:[%s1 + $0x48] sm:$0xff]
  %v134 = vld [vmem:[%s1 + $0x50] sm:$0xff]
  %v135 = vld [vmem:[%s1 + $0x58] sm:$0xff]
  %v136 = vld [vmem:[%s1 + $0x60] sm:$0xff]
  %v137 = vld [vmem:[%s1 + $0x68] sm:$0xff]
  %v138 = vld [vmem:[%s1 + $0x70] sm:$0xff]
  %v139 = vld [vmem:[%s1 + $0x78] sm:$0xff]
  %v140 = vld [vmem:[%s1 + $0x80] sm:$0xff]
  %v141 = vld [vmem:[%s1 + $0x88] sm:$0xff]
  %v142 = vld [vmem:[%s1 + $0x90] sm:$0xff]
  %v143 = vld [vmem:[%s1 + $0x98] sm:$0xff]
  %v144 = vld [vmem:[%s1 + $0xa0] sm:$0xff]
  %v145 = vld [vmem:[%s1 + $0xa8] sm:$0xff]
  %v146 = vld [vmem:[%s1 + $0xb0] sm:$0xff]
  %v147 = vld [vmem:[%s1 + $0xb8] sm:$0xff]
  %v148 = vld [vmem:[%s1 + $0xc0] sm:$0xff]
  %v149 = vld [vmem:[%s1 + $0xc8] sm:$0xff]
  %v150 = vld [vmem:[%s1 + $0xd0] sm:$0xff]
  %v151 = vld [vmem:[%s1 + $0xd8] sm:$0xff]
  %v152 = vld [vmem:[%s1 + $0xe0] sm:$0xff]
  %v153 = vld [vmem:[%s1 + $0xe8] sm:$0xff]
  %v154 = vld [vmem:[%s1 + $0xf0] sm:$0xff]
  %v155 = vld [vmem:[%s1 + $0xf8] sm:$0xff]
  %v156 = vld [vmem:[%s1 + $0x100] sm:$0xff]
  %v157 = vld [vmem:[%s1 + $0x108] sm:$0xff]
  %v158 = vld [vmem:[%s1 + $0x110] sm:$0xff]
  %v159 = vld [vmem:[%s1 + $0x118] sm:$0xff]
  %v160 = vld [vmem:[%s1 + $0x120] sm:$0xff]
  %v161 = vld [vmem:[%s1 + $0x128] sm:$0xff]
  %v162 = vld [vmem:[%s1 + $0x130] sm:$0xff]
  %v163 = vld [vmem:[%s1 + $0x138] sm:$0xff]
  %v164 = vld [vmem:[%s1 + $0x140] sm:$0xff]
  %v165 = vld [vmem:[%s1 + $0x148] sm:$0xff]
  %v166 = vld [vmem:[%s1 + $0x150] sm:$0xff]
  %v167 = vld [vmem:[%s1 + $0x158] sm:$0xff]
  %v168 = vld [vmem:[%s1 + $0x160] sm:$0xff]
  %v169 = vld [vmem:[%s1 + $0x168] sm:$0xff]
  %v170 = vld [vmem:[%s1 + $0x170] sm:$0xff]
  %v171 = vld [vmem:[%s1 + $0x178] sm:$0xff]
  %v172 = vld [vmem:[%s1 + $0x180] sm:$0xff]
  %v173 = vld [vmem:[%s1 + $0x188] sm:$0xff]
  %v174 = vld [vmem:[%s1 + $0x190] sm:$0xff]
  %v175 = vld [vmem:[%s1 + $0x198] sm:$0xff]
  %v176 = vld [vmem:[%s1 + $0x1a0] sm:$0xff]
  %v177 = vld [vmem:[%s1 + $0x1a8] sm:$0xff]
  %v178 = vld [vmem:[%s1 + $0x1b0] sm:$0xff]
  %v179 = vld [vmem:[%s1 + $0x1b8] sm:$0xff]
  %v180 = vld [vmem:[%s1 + $0x1c0] sm:$0xff]
  %v181 = vld [vmem:[%s1 + $0x1c8] sm:$0xff]
  %v182 = vld [vmem:[%s1 + $0x1d0] sm:$0xff]
  %v183 = vld [vmem:[%s1 + $0x1d8] sm:$0xff]
  %v184 = vld [vmem:[%s1 + $0x1e0] sm:$0xff]
  %v185 = vld [vmem:[%s1 + $0x1e8] sm:$0xff]
  %v186 = vld [vmem:[%s1 + $0x1f0] sm:$0xff]
  %v187 = vld [vmem:[%s1 + $0x1f8] sm:$0xff]
  %v188 = vld [vmem:[%s1 + $0x200] sm:$0xff]
  %v189 = vld [vmem:[%s1 + $0x208] sm:$0xff]
  %v190 = vld [vmem:[%s1 + $0x210] sm:$0xff]
  %v191 = vld [vmem:[%s1 + $0x218] sm:$0xff]
  %v192 = vld [vmem:[%s1 + $0x220] sm:$0xff]
  %v193 = vld [vmem:[%s1 + $0x228] sm:$0xff]
  %v194 = vld [vmem:[%s1 + $0x230] sm:$0xff]
  %v195 = vld [vmem:[%s1 + $0x238] sm:$0xff]
  %v196 = vld [vmem:[%s1 + $0x240] sm:$0xff]
  %v197 = vld [vmem:[%s1 + $0x248] sm:$0xff]
  %v198 = vld [vmem:[%s1 + $0x250] sm:$0xff]
  %v199 = vld [vmem:[%s1 + $0x258] sm:$0xff]
  %v200 = vld [vmem:[%s1 + $0x260] sm:$0xff]
  %v201 = vld [vmem:[%s1 + $0x268] sm:$0xff]
  %v202 = vld [vmem:[%s1 + $0x270] sm:$0xff]
  %v203 = vld [vmem:[%s1 + $0x278] sm:$0xff]
  %v204 = vld [vmem:[%s1 + $0x280] sm:$0xff]
  %v205 = vld [vmem:[%s1 + $0x288] sm:$0xff]
  %v206 = vld [vmem:[%s1 + $0x290] sm:$0xff]
  %v207 = vld [vmem:[%s1 + $0x298] sm:$0xff]
  %v208 = vld [vmem:[%s1 + $0x2a0] sm:$0xff]
  %v209 = vld [vmem:[%s1 + $0x2a8] sm:$0xff]
  %v210 = vld [vmem:[%s1 + $0x2b0] sm:$0xff]
  %v211 = vld [vmem:[%s1 + $0x2b8] sm:$0xff]
  %v212 = vld [vmem:[%s1 + $0x2c0] sm:$0xff]
  %v213 = vld [vmem:[%s1 + $0x2c8] sm:$0xff]
  %v214 = vld [vmem:[%s1 + $0x2d0] sm:$0xff]
  %v215 = vld [vmem:[%s1 + $0x2d8] sm:$0xff]
  %v216 = vld [vmem:[%s1 + $0x2e0] sm:$0xff]
  %v217 = vld [vmem:[%s1 + $0x2e8] sm:$0xff]
  %v218 = vld [vmem:[%s1 + $0x2f0] sm:$0xff]
  %v219 = vld [vmem:[%s1 + $0x2f8] sm:$0xff]
  %v220 = vld [vmem:[%s1 + $0x300] sm:$0xff]
  %v221 = vld [vmem:[%s1 + $0x308] sm:$0xff]
  %v222 = vld [vmem:[%s1 + $0x310] sm:$0xff]
  %v223 = vld [vmem:[%s1 + $0x318] sm:$0xff]
  %v224 = vld [vmem:[%s1 + $0x320] sm:$0xff]
  %v225 = vld [vmem:[%s1 + $0x328] sm:$0xff]
  %v226 = vld [vmem:[%s1 + $0x330] sm:$0xff]
  %v227 = vld [vmem:[%s1 + $0x338] sm:$0xff]
  %v228 = vld [vmem:[%s1 + $0x340] sm:$0xff]
  %v229 = vld [vmem:[%s1 + $0x348] sm:$0xff]
  %v230 = vld [vmem:[%s1 + $0x350] sm:$0xff]
  %v231 = vld [vmem:[%s1 + $0x358] sm:$0xff]
  %v232 = vld [vmem:[%s1 + $0x360] sm:$0xff]
  %v233 = vld [vmem:[%s1 + $0x368] sm:$0xff]
  %v234 = vld [vmem:[%s1 + $0x370] sm:$0xff]
  %v235 = vld [vmem:[%s1 + $0x378] sm:$0xff]
  %v236 = vld [vmem:[%s1 + $0x380] sm:$0xff]
  %v237 = vld [vmem:[%s1 + $0x388] sm:$0xff]
  %v238 = vld [vmem:[%s1 + $0x390] sm:$0xff]
  %v239 = vld [vmem:[%s1 + $0x398] sm:$0xff]
  %v240 = vld [vmem:[%s1 + $0x3a0] sm:$0xff]
  %v241 = vld [vmem:[%s1 + $0x3a8] sm:$0xff]
  %v242 = vld [vmem:[%s1 + $0x3b0] sm:$0xff]
  %v243 = vld [vmem:[%s1 + $0x3b8] sm:$0xff]
  %v244 = vld [vmem:[%s1 + $0x3c0] sm:$0xff]
  %v245 = vld [vmem:[%s1 + $0x3c8] sm:$0xff]
  %v246 = vld [vmem:[%s1 + $0x3d0] sm:$0xff]
  %v247 = vld [vmem:[%s1 + $0x3d8] sm:$0xff]
  %v248 = vld [vmem:[%s1 + $0x3e0] sm:$0xff]
  %v249 = vld [vmem:[%s1 + $0x3e8] sm:$0xff]
  %v250 = vld [vmem:[%s1 + $0x3f0] sm:$0xff]
  %v251 = vld [vmem:[%s1 + $0x3f8] sm:$0xff]
  %v252 = vld [vmem:[%s2] sm:$0xff]
  %253 = vmatpush.msra.mxu0 %v139
  %254 = vmatpush.msra.mxu0 %v138
  %255 = vmatpush.msra.mxu0 %v137
  %256 = vmatpush.msra.mxu0 %v136
  %257 = vmatpush.msra.mxu0 %v135
  %258 = vmatpush.msra.mxu0 %v134
  %259 = vmatpush.msra.mxu0 %v133
  %260 = vmatpush.msra.mxu0 %v132
  %261 = vmatpush.msra.mxu0 %v131
  %262 = vmatpush.msra.mxu0 %v130
  %263 = vmatpush.msra.mxu0 %v129
  %264 = vmatpush.msra.mxu0 %v128
  %265 = vmatpush.msra.mxu0 %v127
  %266 = vmatpush.msra.mxu0 %v126
  %267 = vmatpush.msra.mxu0 %v125
  %268 = vmatpush.msra.mxu0 %v124
  %269 = vmatmul.f32.gmra.mxu0 %v108
  %v270 = vpop.f32.mrf.mxu0
  %v271 = vadd.f32 %v252, %v270
  %272 = vmatmul.f32.gmra.mxu0 %v116
  %v273 = vpop.f32.mrf.mxu0
  %v274 = vadd.f32 %v252, %v273
  %275 = vdwg.mxu0
  %276 = vmatpush.msra.mxu0 %v155
  %277 = vmatpush.msra.mxu0 %v154
  %278 = vmatpush.msra.mxu0 %v153
  %279 = vmatpush.msra.mxu0 %v152
  %280 = vmatpush.msra.mxu0 %v151
  %281 = vmatpush.msra.mxu0 %v150
  %282 = vmatpush.msra.mxu0 %v149
  %283 = vmatpush.msra.mxu0 %v148
  %284 = vmatpush.msra.mxu0 %v147
  %285 = vmatpush.msra.mxu0 %v146
  %286 = vmatpush.msra.mxu0 %v145
  %287 = vmatpush.msra.mxu0 %v144
  %288 = vmatpush.msra.mxu0 %v143
  %289 = vmatpush.msra.mxu0 %v142
  %290 = vmatpush.msra.mxu0 %v141
  %291 = vmatpush.msra.mxu0 %v140
  %292 = vmatmul.f32.gmra.mxu0 %v109
  %v293 = vpop.f32.mrf.mxu0
  %v294 = vadd.f32 %v271, %v293
  %295 = vmatmul.f32.gmra.mxu0 %v117
  %v296 = vpop.f32.mrf.mxu0
  %v297 = vadd.f32 %v274, %v296
  %298 = vdwg.mxu0
  %299 = vmatpush.msra.mxu0 %v171
  %300 = vmatpush.msra.mxu0 %v170
  %301 = vmatpush.msra.mxu0 %v169
  %302 = vmatpush.msra.mxu0 %v168
  %303 = vmatpush.msra.mxu0 %v167
  %304 = vmatpush.msra.mxu0 %v166
  %305 = vmatpush.msra.mxu0 %v165
  %306 = vmatpush.msra.mxu0 %v164
  %307 = vmatpush.msra.mxu0 %v163
  %308 = vmatpush.msra.mxu0 %v162
  %309 = vmatpush.msra.mxu0 %v161
  %310 = vmatpush.msra.mxu0 %v160
  %311 = vmatpush.msra.mxu0 %v159
  %312 = vmatpush.msra.mxu0 %v158
  %313 = vmatpush.msra.mxu0 %v157
  %314 = vmatpush.msra.mxu0 %v156
  %315 = vmatmul.f32.gmra.mxu0 %v110
  %v316 = vpop.f32.mrf.mxu0
  %v317 = vadd.f32 %v294, %v316
  %318 = vmatmul.f32.gmra.mxu0 %v118
  %v319 = vpop.f32.mrf.mxu0
  %v320 = vadd.f32 %v297, %v319
  %321 = vdwg.mxu0
  %322 = vmatpush.msra.mxu0 %v187
  %323 = vmatpush.msra.mxu0 %v186
  %324 = vmatpush.msra.mxu0 %v185
  %325 = vmatpush.msra.mxu0 %v184
  %326 = vmatpush.msra.mxu0 %v183
  %327 = vmatpush.msra.mxu0 %v182
  %328 = vmatpush.msra.mxu0 %v181
  %329 = vmatpush.msra.mxu0 %v180
  %330 = vmatpush.msra.mxu0 %v179
  %331 = vmatpush.msra.mxu0 %v178
  %332 = vmatpush.msra.mxu0 %v177
  %333 = vmatpush.msra.mxu0 %v176
  %334 = vmatpush.msra.mxu0 %v175
  %335 = vmatpush.msra.mxu0 %v174
  %336 = vmatpush.msra.mxu0 %v173
  %337 = vmatpush.msra.mxu0 %v172
  %338 = vmatmul.f32.gmra.mxu0 %v111
  %v339 = vpop.f32.mrf.mxu0
  %v340 = vadd.f32 %v317, %v339
  %341 = vmatmul.f32.gmra.mxu0 %v119
  %v342 = vpop.f32.mrf.mxu0
  %v343 = vadd.f32 %v320, %v342
  %344 = vdwg.mxu0
  %345 = vmatpush.msra.mxu0 %v203
  %346 = vmatpush.msra.mxu0 %v202
  %347 = vmatpush.msra.mxu0 %v201
  %348 = vmatpush.msra.mxu0 %v200
  %349 = vmatpush.msra.mxu0 %v199
  %350 = vmatpush.msra.mxu0 %v198
  %351 = vmatpush.msra.mxu0 %v197
  %352 = vmatpush.msra.mxu0 %v196
  %353 = vmatpush.msra.mxu0 %v195
  %354 = vmatpush.msra.mxu0 %v194
  %355 = vmatpush.msra.mxu0 %v193
  %356 = vmatpush.msra.mxu0 %v192
  %357 = vmatpush.msra.mxu0 %v191
  %358 = vmatpush.msra.mxu0 %v190
  %359 = vmatpush.msra.mxu0 %v189
  %360 = vmatpush.msra.mxu0 %v188
  %361 = vmatmul.f32.gmra.mxu0 %v112
  %v362 = vpop.f32.mrf.mxu0
  %v363 = vadd.f32 %v340, %v362
  %364 = vmatmul.f32.gmra.mxu0 %v120
  %v365 = vpop.f32.mrf.mxu0
  %v366 = vadd.f32 %v343, %v365
  %367 = vdwg.mxu0
  %368 = vmatpush.msra.mxu0 %v219
  %369 = vmatpush.msra.mxu0 %v218
  %370 = vmatpush.msra.mxu0 %v217
  %371 = vmatpush.msra.mxu0 %v216
  %372 = vmatpush.msra.mxu0 %v215
  %373 = vmatpush.msra.mxu0 %v214
  %374 = vmatpush.msra.mxu0 %v213
  %375 = vmatpush.msra.mxu0 %v212
  %376 = vmatpush.msra.mxu0 %v211
  %377 = vmatpush.msra.mxu0 %v210
  %378 = vmatpush.msra.mxu0 %v209
  %379 = vmatpush.msra.mxu0 %v208
  %380 = vmatpush.msra.mxu0 %v207
  %381 = vmatpush.msra.mxu0 %v206
  %382 = vmatpush.msra.mxu0 %v205
  %383 = vmatpush.msra.mxu0 %v204
  %384 = vmatmul.f32.gmra.mxu0 %v113
  %v385 = vpop.f32.mrf.mxu0
  %v386 = vadd.f32 %v363, %v385
  %387 = vmatmul.f32.gmra.mxu0 %v121
  %v388 = vpop.f32.mrf.mxu0
  %v389 = vadd.f32 %v366, %v388
  %390 = vdwg.mxu0
  %391 = vmatpush.msra.mxu0 %v235
  %392 = vmatpush.msra.mxu0 %v234
  %393 = vmatpush.msra.mxu0 %v233
  %394 = vmatpush.msra.mxu0 %v232
  %395 = vmatpush.msra.mxu0 %v231
  %396 = vmatpush.msra.mxu0 %v230
  %397 = vmatpush.msra.mxu0 %v229
  %398 = vmatpush.msra.mxu0 %v228
  %399 = vmatpush.msra.mxu0 %v227
  %400 = vmatpush.msra.mxu0 %v226
  %401 = vmatpush.msra.mxu0 %v225
  %402 = vmatpush.msra.mxu0 %v224
  %403 = vmatpush.msra.mxu0 %v223
  %404 = vmatpush.msra.mxu0 %v222
  %405 = vmatpush.msra.mxu0 %v221
  %406 = vmatpush.msra.mxu0 %v220
  %407 = vmatmul.f32.gmra.mxu0 %v114
  %v408 = vpop.f32.mrf.mxu0
  %v409 = vadd.f32 %v386, %v408
  %410 = vmatmul.f32.gmra.mxu0 %v122
  %v411 = vpop.f32.mrf.mxu0
  %v412 = vadd.f32 %v389, %v411
  %413 = vdwg.mxu0
  %414 = vmatpush.msra.mxu0 %v251
  %415 = vmatpush.msra.mxu0 %v250
  %416 = vmatpush.msra.mxu0 %v249
  %417 = vmatpush.msra.mxu0 %v248
  %418 = vmatpush.msra.mxu0 %v247
  %419 = vmatpush.msra.mxu0 %v246
  %420 = vmatpush.msra.mxu0 %v245
  %421 = vmatpush.msra.mxu0 %v244
  %422 = vmatpush.msra.mxu0 %v243
  %423 = vmatpush.msra.mxu0 %v242
  %424 = vmatpush.msra.mxu0 %v241
  %425 = vmatpush.msra.mxu0 %v240
  %426 = vmatpush.msra.mxu0 %v239
  %427 = vmatpush.msra.mxu0 %v238
  %428 = vmatpush.msra.mxu0 %v237
  %429 = vmatpush.msra.mxu0 %v236
  %430 = vmatmul.f32.gmra.mxu0 %v115
  %v431 = vpop.f32.mrf.mxu0
  %v432 = vadd.f32 %v409, %v431
  %433 = vmatmul.f32.gmra.mxu0 %v123
  %v434 = vpop.f32.mrf.mxu0
  %v435 = vadd.f32 %v412, %v434
  %436 = vdwg.mxu0
  %v437 = vld [vmem:[%s3] sm:$0xff]
  %v438 = vld [vmem:[%s3 + $0x8] sm:$0xff]
  %v439 = vld [vmem:[%s3 + $0x10] sm:$0xff]
  %v440 = vld [vmem:[%s3 + $0x18] sm:$0xff]
  %v441 = vld [vmem:[%s3 + $0x20] sm:$0xff]
  %v442 = vld [vmem:[%s3 + $0x28] sm:$0xff]
  %v443 = vld [vmem:[%s3 + $0x30] sm:$0xff]
  %v444 = vld [vmem:[%s3 + $0x38] sm:$0xff]
  %v445 = vld [vmem:[%s4] sm:$0xff]
  %v446 = vld [vmem:[%s4 + $0x8] sm:$0xff]
  %v447 = vld [vmem:[%s4 + $0x10] sm:$0xff]
  %v448 = vld [vmem:[%s4 + $0x18] sm:$0xff]
  %v449 = vld [vmem:[%s4 + $0x20] sm:$0xff]
  %v450 = vld [vmem:[%s4 + $0x28] sm:$0xff]
  %v451 = vld [vmem:[%s4 + $0x30] sm:$0xff]
  %v452 = vld [vmem:[%s4 + $0x38] sm:$0xff]
  %v453 = vld [vmem:[%s4 + $0x40] sm:$0xff]
  %v454 = vld [vmem:[%s4 + $0x48] sm:$0xff]
  %v455 = vld [vmem:[%s4 + $0x50] sm:$0xff]
  %v456 = vld [vmem:[%s4 + $0x58] sm:$0xff]
  %v457 = vld [vmem:[%s4 + $0x60] sm:$0xff]
  %v458 = vld [vmem:[%s4 + $0x68] sm:$0xff]
  %v459 = vld [vmem:[%s4 + $0x70] sm:$0xff]
  %v460 = vld [vmem:[%s4 + $0x78] sm:$0xff]
  %v461 = vld [vmem:[%s4 + $0x80] sm:$0xff]
  %v462 = vld [vmem:[%s4 + $0x88] sm:$0xff]
  %v463 = vld [vmem:[%s4 + $0x90] sm:$0xff]
  %v464 = vld [vmem:[%s4 + $0x98] sm:$0xff]
  %v465 = vld [vmem:[%s4 + $0xa0] sm:$0xff]
  %v466 = vld [vmem:[%s4 + $0xa8] sm:$0xff]
  %v467 = vld [vmem:[%s4 + $0xb0] sm:$0xff]
  %v468 = vld [vmem:[%s4 + $0xb8] sm:$0xff]
  %v469 = vld [vmem:[%s5] sm:$0x7]
  %v471 = vperm.slane %v469, 0
  %v472 = vperm.slane %v469, 1
  %v473 = vperm.slane %v469, 2
  %vm477 = vcmask 523264
  %v479 = vsel %vm477, %v432, 0
  %v482 = vsel %vm477, %v435, 0
  %484 = vmatpush.msra.mxu0 0.0
  %485 = vmatpush.msra.mxu0 0.0
  %486 = vmatpush.msra.mxu0 0.0
  %487 = vmatpush.msra.mxu0 0.0
  %488 = vmatpush.msra.mxu0 0.0
  %489 = vmatpush.msra.mxu0 0.0
  %490 = vmatpush.msra.mxu0 0.0
  %491 = vmatpush.msra.mxu0 0.0
  %492 = vmatpush.msra.mxu0 %v466
  %493 = vmatpush.msra.mxu0 %v463
  %494 = vmatpush.msra.mxu0 %v460
  %495 = vmatpush.msra.mxu0 %v457
  %496 = vmatpush.msra.mxu0 %v454
  %497 = vmatpush.msra.mxu0 %v451
  %498 = vmatpush.msra.mxu0 %v448
  %499 = vmatpush.msra.mxu0 %v445
  %500 = vmatmul.f32.gmra.mxu0 %v479
  %v501 = vpop.f32.mrf.mxu0
  %v502 = vadd.f32 %v471, %v501
  %503 = vmatmul.f32.gmra.mxu0 %v482
  %v504 = vpop.f32.mrf.mxu0
  %v505 = vadd.f32 %v471, %v504
  %506 = vdwg.mxu0
  %507 = vmatpush.msra.mxu0 0.0
  %508 = vmatpush.msra.mxu0 0.0
  %509 = vmatpush.msra.mxu0 0.0
  %510 = vmatpush.msra.mxu0 0.0
  %511 = vmatpush.msra.mxu0 0.0
  %512 = vmatpush.msra.mxu0 0.0
  %513 = vmatpush.msra.mxu0 0.0
  %514 = vmatpush.msra.mxu0 0.0
  %515 = vmatpush.msra.mxu0 %v467
  %516 = vmatpush.msra.mxu0 %v464
  %517 = vmatpush.msra.mxu0 %v461
  %518 = vmatpush.msra.mxu0 %v458
  %519 = vmatpush.msra.mxu0 %v455
  %520 = vmatpush.msra.mxu0 %v452
  %521 = vmatpush.msra.mxu0 %v449
  %522 = vmatpush.msra.mxu0 %v446
  %523 = vmatmul.f32.gmra.mxu0 %v479
  %v524 = vpop.f32.mrf.mxu0
  %v525 = vadd.f32 %v472, %v524
  %526 = vmatmul.f32.gmra.mxu0 %v482
  %v527 = vpop.f32.mrf.mxu0
  %v528 = vadd.f32 %v472, %v527
  %529 = vdwg.mxu0
  %530 = vmatpush.msra.mxu0 0.0
  %531 = vmatpush.msra.mxu0 0.0
  %532 = vmatpush.msra.mxu0 0.0
  %533 = vmatpush.msra.mxu0 0.0
  %534 = vmatpush.msra.mxu0 0.0
  %535 = vmatpush.msra.mxu0 0.0
  %536 = vmatpush.msra.mxu0 0.0
  %537 = vmatpush.msra.mxu0 0.0
  %538 = vmatpush.msra.mxu0 %v468
  %539 = vmatpush.msra.mxu0 %v465
  %540 = vmatpush.msra.mxu0 %v462
  %541 = vmatpush.msra.mxu0 %v459
  %542 = vmatpush.msra.mxu0 %v456
  %543 = vmatpush.msra.mxu0 %v453
  %544 = vmatpush.msra.mxu0 %v450
  %545 = vmatpush.msra.mxu0 %v447
  %546 = vmatmul.f32.gmra.mxu0 %v479
  %v547 = vpop.f32.mrf.mxu0
  %v548 = vadd.f32 %v473, %v547
  %549 = vmatmul.f32.gmra.mxu0 %v482
  %v550 = vpop.f32.mrf.mxu0
  %v551 = vadd.f32 %v473, %v550
  %552 = vdwg.mxu0
  %v553 = vmul.f32 %v502, %v525
  %v554 = vmul.f32 %v505, %v528
  %v556 = vsel %vm477, %v553, 0
  %v559 = vsel %vm477, %v554, 0
  %561 = vmatpush.msra.mxu0 0.0
  %562 = vmatpush.msra.mxu0 0.0
  %563 = vmatpush.msra.mxu0 0.0
  %564 = vmatpush.msra.mxu0 0.0
  %565 = vmatpush.msra.mxu0 0.0
  %566 = vmatpush.msra.mxu0 0.0
  %567 = vmatpush.msra.mxu0 0.0
  %568 = vmatpush.msra.mxu0 0.0
  %569 = vmatpush.msra.mxu0 %v444
  %570 = vmatpush.msra.mxu0 %v443
  %571 = vmatpush.msra.mxu0 %v442
  %572 = vmatpush.msra.mxu0 %v441
  %573 = vmatpush.msra.mxu0 %v440
  %574 = vmatpush.msra.mxu0 %v439
  %575 = vmatpush.msra.mxu0 %v438
  %576 = vmatpush.msra.mxu0 %v437
  %577 = vmatmul.f32.gmra.mxu0 %v556
  %v578 = vpop.f32.mrf.mxu0
  %v579 = vadd.f32 0.0, %v578
  %580 = vmatmul.f32.gmra.mxu0 %v559
  %v581 = vpop.f32.mrf.mxu0
  %v582 = vadd.f32 0.0, %v581
  %583 = vdwg.mxu0
  %v584 = vmul.f32 %v502, %v528
  %v585 = vmul.f32 %v505, %v525
  %v587 = vsel %vm477, %v584, 0
  %v590 = vsel %vm477, %v585, 0
  %592 = vmatpush.msra.mxu0 0.0
  %593 = vmatpush.msra.mxu0 0.0
  %594 = vmatpush.msra.mxu0 0.0
  %595 = vmatpush.msra.mxu0 0.0
  %596 = vmatpush.msra.mxu0 0.0
  %597 = vmatpush.msra.mxu0 0.0
  %598 = vmatpush.msra.mxu0 0.0
  %599 = vmatpush.msra.mxu0 0.0
  %600 = vmatpush.msra.mxu0 %v444
  %601 = vmatpush.msra.mxu0 %v443
  %602 = vmatpush.msra.mxu0 %v442
  %603 = vmatpush.msra.mxu0 %v441
  %604 = vmatpush.msra.mxu0 %v440
  %605 = vmatpush.msra.mxu0 %v439
  %606 = vmatpush.msra.mxu0 %v438
  %607 = vmatpush.msra.mxu0 %v437
  %608 = vmatmul.f32.gmra.mxu0 %v587
  %v609 = vpop.f32.mrf.mxu0
  %v610 = vadd.f32 0.0, %v609
  %611 = vmatmul.f32.gmra.mxu0 %v590
  %v612 = vpop.f32.mrf.mxu0
  %v613 = vadd.f32 0.0, %v612
  %614 = vdwg.mxu0
  %v615 = vmax.f32 %v579, %v610
  %v616 = vmax.f32 %v582, %v613
  %v617 = vsub.f32 %v579, %v615
  %v618 = vsub.f32 %v582, %v616
  %v619 = vmul.f32 %v617, 1.442695
  %v620 = vpow.pop %v619
  %v621 = vmul.f32 %v618, 1.442695
  %v622 = vpow.pop %v621
  %v623 = vsub.f32 %v610, %v615
  %v624 = vsub.f32 %v613, %v616
  %v625 = vmul.f32 %v623, 1.442695
  %v626 = vpow.pop %v625
  %v627 = vmul.f32 %v624, 1.442695
  %v628 = vpow.pop %v627
  %v629 = vadd.f32 %v620, %v626
  %v630 = vadd.f32 %v622, %v628
  %v631 = vrcp.pop %v629
  %v632 = vrcp.pop %v630
  %v633 = vmul.f32 %v620, %v548
  %v634 = vmul.f32 %v622, %v551
  %v635 = vmul.f32 %v626, %v551
  %v636 = vmul.f32 %v628, %v548
  %v637 = vadd.f32 %v633, %v635
  %v638 = vadd.f32 %v634, %v636
  %v639 = vmul.f32 %v637, %v631
  %v640 = vmul.f32 %v638, %v632
  %v641 = vld [vmem:[%s6] sm:$0xff]
  %v642 = vld [vmem:[%s6 + $0x8] sm:$0xff]
  %v643 = vld [vmem:[%s6 + $0x10] sm:$0xff]
  %v644 = vld [vmem:[%s6 + $0x18] sm:$0xff]
  %v645 = vld [vmem:[%s6 + $0x20] sm:$0xff]
  %v646 = vld [vmem:[%s6 + $0x28] sm:$0xff]
  %v647 = vld [vmem:[%s6 + $0x30] sm:$0xff]
  %v648 = vld [vmem:[%s6 + $0x38] sm:$0xff]
  %v649 = vld [vmem:[%s7] sm:$0x1]
  %v651 = vperm.slane %v649, 0
  %v654 = vsel %vm477, %v639, 0
  %v657 = vsel %vm477, %v640, 0
  %659 = vmatpush.msra.mxu0 0.0
  %660 = vmatpush.msra.mxu0 0.0
  %661 = vmatpush.msra.mxu0 0.0
  %662 = vmatpush.msra.mxu0 0.0
  %663 = vmatpush.msra.mxu0 0.0
  %664 = vmatpush.msra.mxu0 0.0
  %665 = vmatpush.msra.mxu0 0.0
  %666 = vmatpush.msra.mxu0 0.0
  %667 = vmatpush.msra.mxu0 %v648
  %668 = vmatpush.msra.mxu0 %v647
  %669 = vmatpush.msra.mxu0 %v646
  %670 = vmatpush.msra.mxu0 %v645
  %671 = vmatpush.msra.mxu0 %v644
  %672 = vmatpush.msra.mxu0 %v643
  %673 = vmatpush.msra.mxu0 %v642
  %674 = vmatpush.msra.mxu0 %v641
  %675 = vmatmul.f32.gmra.mxu0 %v654
  %v676 = vpop.f32.mrf.mxu0
  %v677 = vadd.f32 %v651, %v676
  %678 = vmatmul.f32.gmra.mxu0 %v657
  %v679 = vpop.f32.mrf.mxu0
  %v680 = vadd.f32 %v651, %v679
  %681 = vdwg.mxu0
  %v682 = vadd.f32 %v432, %v677
  %v683 = vadd.f32 %v435, %v680
  %v684 = vld [vmem:[%s12] sm:$0x1]
  %v685 = vld [vmem:[%s13] sm:$0x1]
  %v686 = vsel %vm477, %v682, 0.0
  %687 = vadd.xlane.f32.xlu0 %v686
  %v688 = vpop.xlane.xlu0 %687
  %v689 = vsel %vm477, %v683, 0.0
  %690 = vadd.xlane.f32.xlu0 %v689
  %v691 = vpop.xlane.xlu0 %690
  %v692 = vrcp.pop 64.0
  %v693 = vmul.f32 64.0, %v692
  %v694 = vsub.f32 1.0, %v693
  %v695 = vmul.f32 %v692, %v694
  %v696 = vadd.f32 %v692, %v695
  %vm697 = vweird.f32 %v692
  %v698 = vsel %vm697, %v692, %v696
  %v699 = vmul.f32 %v688, %v698
  %v700 = vmul.f32 %v691, %v698
  %v701 = vsub.f32 %v682, %v699
  %v702 = vsub.f32 %v683, %v700
  %v703 = vmul.f32 %v701, %v701
  %v704 = vmul.f32 %v702, %v702
  %v705 = vsel %vm477, %v703, 0.0
  %706 = vadd.xlane.f32.xlu0 %v705
  %v707 = vpop.xlane.xlu0 %706
  %v708 = vsel %vm477, %v704, 0.0
  %709 = vadd.xlane.f32.xlu0 %v708
  %v710 = vpop.xlane.xlu0 %709
  %v711 = vmul.f32 %v707, %v698
  %v712 = vmul.f32 %v710, %v698
  %v713 = vadd.f32 %v711, 1e-05
  %v714 = vadd.f32 %v712, 1e-05
  %v715 = vrsqrt.pop %v713
  %v716 = vmul.f32 %v715, %v713
  %v717 = vmul.f32 %v716, %v715
  %v718 = vmul.f32 0.5, %v717
  %v719 = vsub.f32 1.5, %v718
  %v720 = vmul.f32 %v715, %v719
  %vm721 = vweird.f32 %v713
  %vm722 = vweird.f32 %v715
  %vm723 = vmor %vm721, %vm722
  %v724 = vsel %vm723, %v715, %v720
  %v725 = vrsqrt.pop %v714
  %v726 = vmul.f32 %v725, %v714
  %v727 = vmul.f32 %v726, %v725
  %v728 = vmul.f32 0.5, %v727
  %v729 = vsub.f32 1.5, %v728
  %v730 = vmul.f32 %v725, %v729
  %vm731 = vweird.f32 %v714
  %vm732 = vweird.f32 %v725
  %vm733 = vmor %vm731, %vm732
  %v734 = vsel %vm733, %v725, %v730
  %v735 = vmul.f32 %v701, %v724
  %v736 = vmul.f32 %v702, %v734
  %v738 = vperm.slane %v684, 0
  %v740 = vmul.f32 %v735, %v738
  %v741 = vmul.f32 %v736, %v738
  %v743 = vperm.slane %v685, 0
  %v745 = vadd.f32 %v740, %v743
  %v746 = vadd.f32 %v741, %v743
  %v747 = vld [vmem:[%s8] sm:$0xff]
  %v748 = vld [vmem:[%s8 + $0x8] sm:$0xff]
  %v749 = vld [vmem:[%s8 + $0x10] sm:$0xff]
  %v750 = vld [vmem:[%s8 + $0x18] sm:$0xff]
  %v751 = vld [vmem:[%s8 + $0x20] sm:$0xff]
  %v752 = vld [vmem:[%s8 + $0x28] sm:$0xff]
  %v753 = vld [vmem:[%s8 + $0x30] sm:$0xff]
  %v754 = vld [vmem:[%s8 + $0x38] sm:$0xff]
  %v755 = vld [vmem:[%s9] sm:$0x1]
  %v757 = vperm.slane %v755, 0
  %v760 = vsel %vm477, %v745, 0
  %v763 = vsel %vm477, %v746, 0
  %765 = vmatpush.msra.mxu0 0.0
  %766 = vmatpush.msra.mxu0 0.0
  %767 = vmatpush.msra.mxu0 0.0
  %768 = vmatpush.msra.mxu0 0.0
  %769 = vmatpush.msra.mxu0 0.0
  %770 = vmatpush.msra.mxu0 0.0
  %771 = vmatpush.msra.mxu0 0.0
  %772 = vmatpush.msra.mxu0 0.0
  %773 = vmatpush.msra.mxu0 %v754
  %774 = vmatpush.msra.mxu0 %v753
  %775 = vmatpush.msra.mxu0 %v752
  %776 = vmatpush.msra.mxu0 %v751
  %777 = vmatpush.msra.mxu0 %v750
  %778 = vmatpush.msra.mxu0 %v749
  %779 = vmatpush.msra.mxu0 %v748
  %780 = vmatpush.msra.mxu0 %v747
  %781 = vmatmul.f32.gmra.mxu0 %v760
  %v782 = vpop.f32.mrf.mxu0
  %v783 = vadd.f32 %v757, %v782
  %784 = vmatmul.f32.gmra.mxu0 %v763
  %v785 = vpop.f32.mrf.mxu0
  %v786 = vadd.f32 %v757, %v785
  %787 = vdwg.mxu0
  %v788 = vmax.f32 %v783, 0.0
  %v789 = vmax.f32 %v786, 0.0
  %v790 = vld [vmem:[%s10] sm:$0xff]
  %v791 = vld [vmem:[%s10 + $0x8] sm:$0xff]
  %v792 = vld [vmem:[%s10 + $0x10] sm:$0xff]
  %v793 = vld [vmem:[%s10 + $0x18] sm:$0xff]
  %v794 = vld [vmem:[%s10 + $0x20] sm:$0xff]
  %v795 = vld [vmem:[%s10 + $0x28] sm:$0xff]
  %v796 = vld [vmem:[%s10 + $0x30] sm:$0xff]
  %v797 = vld [vmem:[%s10 + $0x38] sm:$0xff]
  %v798 = vld [vmem:[%s10 + $0x40] sm:$0xff]
  %v799 = vld [vmem:[%s10 + $0x48] sm:$0xff]
  %v800 = vld [vmem:[%s10 + $0x50] sm:$0xff]
  %v801 = vld [vmem:[%s10 + $0x58] sm:$0xff]
  %v802 = vld [vmem:[%s10 + $0x60] sm:$0xff]
  %v803 = vld [vmem:[%s10 + $0x68] sm:$0xff]
  %v804 = vld [vmem:[%s10 + $0x70] sm:$0xff]
  %v805 = vld [vmem:[%s10 + $0x78] sm:$0xff]
  %v806 = vld [vmem:[%s11] sm:$0x1]
  %v808 = vperm.slane %v806, 0
  %810 = vmatpush.msra.mxu0 %v805
  %811 = vmatpush.msra.mxu0 %v804
  %812 = vmatpush.msra.mxu0 %v803
  %813 = vmatpush.msra.mxu0 %v802
  %814 = vmatpush.msra.mxu0 %v801
  %815 = vmatpush.msra.mxu0 %v800
  %816 = vmatpush.msra.mxu0 %v799
  %817 = vmatpush.msra.mxu0 %v798
  %818 = vmatpush.msra.mxu0 %v797
  %819 = vmatpush.msra.mxu0 %v796
  %820 = vmatpush.msra.mxu0 %v795
  %821 = vmatpush.msra.mxu0 %v794
  %822 = vmatpush.msra.mxu0 %v793
  %823 = vmatpush.msra.mxu0 %v792
  %824 = vmatpush.msra.mxu0 %v791
  %825 = vmatpush.msra.mxu0 %v790
  %826 = vmatmul.f32.gmra.mxu0 %v788
  %v827 = vpop.f32.mrf.mxu0
  %v828 = vadd.f32 %v808, %v827
  %829 = vmatmul.f32.gmra.mxu0 %v789
  %v830 = vpop.f32.mrf.mxu0
  %v831 = vadd.f32 %v808, %v830
  %832 = vdwg.mxu0
  %v833 = vadd.f32 %v745, %v828
  %v834 = vadd.f32 %v746, %v831
  %v835 = vld [vmem:[%s14] sm:$0x1]
  %v836 = vld [vmem:[%s15] sm:$0x1]
  %v837 = vsel %vm477, %v833, 0.0
  %838 = vadd.xlane.f32.xlu0 %v837
  %v839 = vpop.xlane.xlu0 %838
  %v840 = vsel %vm477, %v834, 0.0
  %841 = vadd.xlane.f32.xlu0 %v840
  %v842 = vpop.xlane.xlu0 %841
  %v843 = vmul.f32 %v839, %v698
  %v844 = vmul.f32 %v842, %v698
  %v845 = vsub.f32 %v833, %v843
  %v846 = vsub.f32 %v834, %v844
  %v847 = vmul.f32 %v845, %v845
  %v848 = vmul.f32 %v846, %v846
  %v849 = vsel %vm477, %v847, 0.0
  %850 = vadd.xlane.f32.xlu0 %v849
  %v851 = vpop.xlane.xlu0 %850
  %v852 = vsel %vm477, %v848, 0.0
  %853 = vadd.xlane.f32.xlu0 %v852
  %v854 = vpop.xlane.xlu0 %853
  %v855 = vmul.f32 %v851, %v698
  %v856 = vmul.f32 %v854, %v698
  %v857 = vadd.f32 %v855, 1e-05
  %v858 = vadd.f32 %v856, 1e-05
  %v859 = vrsqrt.pop %v857
  %v860 = vmul.f32 %v859, %v857
  %v861 = vmul.f32 %v860, %v859
  %v862 = vmul.f32 0.5, %v861
  %v863 = vsub.f32 1.5, %v862
  %v864 = vmul.f32 %v859, %v863
  %vm865 = vweird.f32 %v857
  %vm866 = vweird.f32 %v859
  %vm867 = vmor %vm865, %vm866
  %v868 = vsel %vm867, %v859, %v864
  %v869 = vrsqrt.pop %v858
  %v870 = vmul.f32 %v869, %v858
  %v871 = vmul.f32 %v870, %v869
  %v872 = vmul.f32 0.5, %v871
  %v873 = vsub.f32 1.5, %v872
  %v874 = vmul.f32 %v869, %v873
  %vm875 = vweird.f32 %v858
  %vm876 = vweird.f32 %v869
  %vm877 = vmor %vm875, %vm876
  %v878 = vsel %vm877, %v869, %v874
  %v879 = vmul.f32 %v845, %v868
  %v880 = vmul.f32 %v846, %v878
  %v882 = vperm.slane %v835, 0
  %v884 = vmul.f32 %v879, %v882
  %v885 = vmul.f32 %v880, %v882
  %v887 = vperm.slane %v836, 0
  %v889 = vadd.f32 %v884, %v887
  %v890 = vadd.f32 %v885, %v887
  %s891 = scalar_lea.vmem %s4, 192
  %v892 = vld [vmem:[%s891] sm:$0xff]
  %v893 = vld [vmem:[%s891 + $0x8] sm:$0xff]
  %v894 = vld [vmem:[%s891 + $0x10] sm:$0xff]
  %v895 = vld [vmem:[%s891 + $0x18] sm:$0xff]
  %v896 = vld [vmem:[%s891 + $0x20] sm:$0xff]
  %v897 = vld [vmem:[%s891 + $0x28] sm:$0xff]
  %v898 = vld [vmem:[%s891 + $0x30] sm:$0xff]
  %v899 = vld [vmem:[%s891 + $0x38] sm:$0xff]
  %v900 = vld [vmem:[%s891 + $0x40] sm:$0xff]
  %v901 = vld [vmem:[%s891 + $0x48] sm:$0xff]
  %v902 = vld [vmem:[%s891 + $0x50] sm:$0xff]
  %v903 = vld [vmem:[%s891 + $0x58] sm:$0xff]
  %v904 = vld [vmem:[%s891 + $0x60] sm:$0xff]
  %v905 = vld [vmem:[%s891 + $0x68] sm:$0xff]
  %v906 = vld [vmem:[%s891 + $0x70] sm:$0xff]
  %v907 = vld [vmem:[%s891 + $0x78] sm:$0xff]
  %v908 = vld [vmem:[%s891 + $0x80] sm:$0xff]
  %v909 = vld [vmem:[%s891 + $0x88] sm:$0xff]
  %v910 = vld [vmem:[%s891 + $0x90] sm:$0xff]
  %v911 = vld [vmem:[%s891 + $0x98] sm:$0xff]
  %v912 = vld [vmem:[%s891 + $0xa0] sm:$0xff]
  %v913 = vld [vmem:[%s891 + $0xa8] sm:$0xff]
  %v914 = vld [vmem:[%s891 + $0xb0] sm:$0xff]
  %v915 = vld [vmem:[%s891 + $0xb8] sm:$0xff]
  %s916 = scalar_lea.vmem %s5, 3
  %v917 = vld [vmem:[%s916] sm:$0x7]
  %v919 = vperm.slane %v917, 0
  %v920 = vperm.slane %v917, 1
  %v921 = vperm.slane %v917, 2
  %v926 = vsel %vm477, %v889, 0
  %v929 = vsel %vm477, %v890, 0
  %931 = vmatpush.msra.mxu0 0.0
  %932 = vmatpush.msra.mxu0 0.0
  %933 = vmatpush.msra.mxu0 0.0
  %934 = vmatpush.msra.mxu0 0.0
  %935 = vmatpush.msra.mxu0 0.0
  %936 = vmatpush.msra.mxu0 0.0
  %937 = vmatpush.msra.mxu0 0.0
  %938 = vmatpush.msra.mxu0 0.0
  %939 = vmatpush.msra.mxu0 %v913
  %940 = vmatpush.msra.mxu0 %v910
  %941 = vmatpush.msra.mxu0 %v907
  %942 = vmatpush.msra.mxu0 %v904
  %943 = vmatpush.msra.mxu0 %v901
  %944 = vmatpush.msra.mxu0 %v898
  %945 = vmatpush.msra.mxu0 %v895
  %946 = vmatpush.msra.mxu0 %v892
  %947 = vmatmul.f32.gmra.mxu0 %v926
  %v948 = vpop.f32.mrf.mxu0
  %v949 = vadd.f32 %v919, %v948
  %950 = vmatmul.f32.gmra.mxu0 %v929
  %v951 = vpop.f32.mrf.mxu0
  %v952 = vadd.f32 %v919, %v951
  %953 = vdwg.mxu0
  %954 = vmatpush.msra.mxu0 0.0
  %955 = vmatpush.msra.mxu0 0.0
  %956 = vmatpush.msra.mxu0 0.0
  %957 = vmatpush.msra.mxu0 0.0
  %958 = vmatpush.msra.mxu0 0.0
  %959 = vmatpush.msra.mxu0 0.0
  %960 = vmatpush.msra.mxu0 0.0
  %961 = vmatpush.msra.mxu0 0.0
  %962 = vmatpush.msra.mxu0 %v914
  %963 = vmatpush.msra.mxu0 %v911
  %964 = vmatpush.msra.mxu0 %v908
  %965 = vmatpush.msra.mxu0 %v905
  %966 = vmatpush.msra.mxu0 %v902
  %967 = vmatpush.msra.mxu0 %v899
  %968 = vmatpush.msra.mxu0 %v896
  %969 = vmatpush.msra.mxu0 %v893
  %970 = vmatmul.f32.gmra.mxu0 %v926
  %v971 = vpop.f32.mrf.mxu0
  %v972 = vadd.f32 %v920, %v971
  %973 = vmatmul.f32.gmra.mxu0 %v929
  %v974 = vpop.f32.mrf.mxu0
  %v975 = vadd.f32 %v920, %v974
  %976 = vdwg.mxu0
  %977 = vmatpush.msra.mxu0 0.0
  %978 = vmatpush.msra.mxu0 0.0
  %979 = vmatpush.msra.mxu0 0.0
  %980 = vmatpush.msra.mxu0 0.0
  %981 = vmatpush.msra.mxu0 0.0
  %982 = vmatpush.msra.mxu0 0.0
  %983 = vmatpush.msra.mxu0 0.0
  %984 = vmatpush.msra.mxu0 0.0
  %985 = vmatpush.msra.mxu0 %v915
  %986 = vmatpush.msra.mxu0 %v912
  %987 = vmatpush.msra.mxu0 %v909
  %988 = vmatpush.msra.mxu0 %v906
  %989 = vmatpush.msra.mxu0 %v903
  %990 = vmatpush.msra.mxu0 %v900
  %991 = vmatpush.msra.mxu0 %v897
  %992 = vmatpush.msra.mxu0 %v894
  %993 = vmatmul.f32.gmra.mxu0 %v926
  %v994 = vpop.f32.mrf.mxu0
  %v995 = vadd.f32 %v921, %v994
  %996 = vmatmul.f32.gmra.mxu0 %v929
  %v997 = vpop.f32.mrf.mxu0
  %v998 = vadd.f32 %v921, %v997
  %999 = vdwg.mxu0
  %v1000 = vmul.f32 %v949, %v972
  %v1001 = vmul.f32 %v952, %v975
  %v1003 = vsel %vm477, %v1000, 0
  %v1006 = vsel %vm477, %v1001, 0
  %1008 = vmatpush.msra.mxu0 0.0
  %1009 = vmatpush.msra.mxu0 0.0
  %1010 = vmatpush.msra.mxu0 0.0
  %1011 = vmatpush.msra.mxu0 0.0
  %1012 = vmatpush.msra.mxu0 0.0
  %1013 = vmatpush.msra.mxu0 0.0
  %1014 = vmatpush.msra.mxu0 0.0
  %1015 = vmatpush.msra.mxu0 0.0
  %1016 = vmatpush.msra.mxu0 %v444
  %1017 = vmatpush.msra.mxu0 %v443
  %1018 = vmatpush.msra.mxu0 %v442
  %1019 = vmatpush.msra.mxu0 %v441
  %1020 = vmatpush.msra.mxu0 %v440
  %1021 = vmatpush.msra.mxu0 %v439
  %1022 = vmatpush.msra.mxu0 %v438
  %1023 = vmatpush.msra.mxu0 %v437
  %1024 = vmatmul.f32.gmra.mxu0 %v1003
  %v1025 = vpop.f32.mrf.mxu0
  %v1026 = vadd.f32 0.0, %v1025
  %1027 = vmatmul.f32.gmra.mxu0 %v1006
  %v1028 = vpop.f32.mrf.mxu0
  %v1029 = vadd.f32 0.0, %v1028
  %1030 = vdwg.mxu0
  %v1031 = vmul.f32 %v949, %v975
  %v1032 = vmul.f32 %v952, %v972
  %v1034 = vsel %vm477, %v1031, 0
  %v1037 = vsel %vm477, %v1032, 0
  %1039 = vmatpush.msra.mxu0 0.0
  %1040 = vmatpush.msra.mxu0 0.0
  %1041 = vmatpush.msra.mxu0 0.0
  %1042 = vmatpush.msra.mxu0 0.0
  %1043 = vmatpush.msra.mxu0 0.0
  %1044 = vmatpush.msra.mxu0 0.0
  %1045 = vmatpush.msra.mxu0 0.0
  %1046 = vmatpush.msra.mxu0 0.0
  %1047 = vmatpush.msra.mxu0 %v444
  %1048 = vmatpush.msra.mxu0 %v443
  %1049 = vmatpush.msra.mxu0 %v442
  %1050 = vmatpush.msra.mxu0 %v441
  %1051 = vmatpush.msra.mxu0 %v440
  %1052 = vmatpush.msra.mxu0 %v439
  %1053 = vmatpush.msra.mxu0 %v438
  %1054 = vmatpush.msra.mxu0 %v437
  %1055 = vmatmul.f32.gmra.mxu0 %v1034
  %v1056 = vpop.f32.mrf.mxu0
  %v1057 = vadd.f32 0.0, %v1056
  %1058 = vmatmul.f32.gmra.mxu0 %v1037
  %v1059 = vpop.f32.mrf.mxu0
  %v1060 = vadd.f32 0.0, %v1059
  %1061 = vdwg.mxu0
  %v1062 = vmax.f32 %v1026, %v1057
  %v1063 = vmax.f32 %v1029, %v1060
  %v1064 = vsub.f32 %v1026, %v1062
  %v1065 = vsub.f32 %v1029, %v1063
  %v1066 = vmul.f32 %v1064, 1.442695
  %v1067 = vpow.pop %v1066
  %v1068 = vmul.f32 %v1065, 1.442695
  %v1069 = vpow.pop %v1068
  %v1070 = vsub.f32 %v1057, %v1062
  %v1071 = vsub.f32 %v1060, %v1063
  %v1072 = vmul.f32 %v1070, 1.442695
  %v1073 = vpow.pop %v1072
  %v1074 = vmul.f32 %v1071, 1.442695
  %v1075 = vpow.pop %v1074
  %v1076 = vadd.f32 %v1067, %v1073
  %v1077 = vadd.f32 %v1069, %v1075
  %v1078 = vrcp.pop %v1076
  %v1079 = vrcp.pop %v1077
  %v1080 = vmul.f32 %v1067, %v995
  %v1081 = vmul.f32 %v1069, %v998
  %v1082 = vmul.f32 %v1073, %v998
  %v1083 = vmul.f32 %v1075, %v995
  %v1084 = vadd.f32 %v1080, %v1082
  %v1085 = vadd.f32 %v1081, %v1083
  %v1086 = vmul.f32 %v1084, %v1078
  %v1087 = vmul.f32 %v1085, %v1079
  %s1088 = scalar_lea.vmem %s6, 64
  %v1089 = vld [vmem:[%s1088] sm:$0xff]
  %v1090 = vld [vmem:[%s1088 + $0x8] sm:$0xff]
  %v1091 = vld [vmem:[%s1088 + $0x10] sm:$0xff]
  %v1092 = vld [vmem:[%s1088 + $0x18] sm:$0xff]
  %v1093 = vld [vmem:[%s1088 + $0x20] sm:$0xff]
  %v1094 = vld [vmem:[%s1088 + $0x28] sm:$0xff]
  %v1095 = vld [vmem:[%s1088 + $0x30] sm:$0xff]
  %v1096 = vld [vmem:[%s1088 + $0x38] sm:$0xff]
  %s1097 = scalar_lea.vmem %s7, 1
  %v1098 = vld [vmem:[%s1097] sm:$0x1]
  %v1100 = vperm.slane %v1098, 0
  %v1103 = vsel %vm477, %v1086, 0
  %v1106 = vsel %vm477, %v1087, 0
  %1108 = vmatpush.msra.mxu0 0.0
  %1109 = vmatpush.msra.mxu0 0.0
  %1110 = vmatpush.msra.mxu0 0.0
  %1111 = vmatpush.msra.mxu0 0.0
  %1112 = vmatpush.msra.mxu0 0.0
  %1113 = vmatpush.msra.mxu0 0.0
  %1114 = vmatpush.msra.mxu0 0.0
  %1115 = vmatpush.msra.mxu0 0.0
  %1116 = vmatpush.msra.mxu0 %v1096
  %1117 = vmatpush.msra.mxu0 %v1095
  %1118 = vmatpush.msra.mxu0 %v1094
  %1119 = vmatpush.msra.mxu0 %v1093
  %1120 = vmatpush.msra.mxu0 %v1092
  %1121 = vmatpush.msra.mxu0 %v1091
  %1122 = vmatpush.msra.mxu0 %v1090
  %1123 = vmatpush.msra.mxu0 %v1089
  %1124 = vmatmul.f32.gmra.mxu0 %v1103
  %v1125 = vpop.f32.mrf.mxu0
  %v1126 = vadd.f32 %v1100, %v1125
  %1127 = vmatmul.f32.gmra.mxu0 %v1106
  %v1128 = vpop.f32.mrf.mxu0
  %v1129 = vadd.f32 %v1100, %v1128
  %1130 = vdwg.mxu0
  %v1131 = vadd.f32 %v889, %v1126
  %v1132 = vadd.f32 %v890, %v1129
  %s1133 = scalar_lea.vmem %s12, 1
  %v1134 = vld [vmem:[%s1133] sm:$0x1]
  %s1135 = scalar_lea.vmem %s13, 1
  %v1136 = vld [vmem:[%s1135] sm:$0x1]
  %v1137 = vsel %vm477, %v1131, 0.0
  %1138 = vadd.xlane.f32.xlu0 %v1137
  %v1139 = vpop.xlane.xlu0 %1138
  %v1140 = vsel %vm477, %v1132, 0.0
  %1141 = vadd.xlane.f32.xlu0 %v1140
  %v1142 = vpop.xlane.xlu0 %1141
  %v1143 = vmul.f32 %v1139, %v698
  %v1144 = vmul.f32 %v1142, %v698
  %v1145 = vsub.f32 %v1131, %v1143
  %v1146 = vsub.f32 %v1132, %v1144
  %v1147 = vmul.f32 %v1145, %v1145
  %v1148 = vmul.f32 %v1146, %v1146
  %v1149 = vsel %vm477, %v1147, 0.0
  %1150 = vadd.xlane.f32.xlu0 %v1149
  %v1151 = vpop.xlane.xlu0 %1150
  %v1152 = vsel %vm477, %v1148, 0.0
  %1153 = vadd.xlane.f32.xlu0 %v1152
  %v1154 = vpop.xlane.xlu0 %1153
  %v1155 = vmul.f32 %v1151, %v698
  %v1156 = vmul.f32 %v1154, %v698
  %v1157 = vadd.f32 %v1155, 1e-05
  %v1158 = vadd.f32 %v1156, 1e-05
  %v1159 = vrsqrt.pop %v1157
  %v1160 = vmul.f32 %v1159, %v1157
  %v1161 = vmul.f32 %v1160, %v1159
  %v1162 = vmul.f32 0.5, %v1161
  %v1163 = vsub.f32 1.5, %v1162
  %v1164 = vmul.f32 %v1159, %v1163
  %vm1165 = vweird.f32 %v1157
  %vm1166 = vweird.f32 %v1159
  %vm1167 = vmor %vm1165, %vm1166
  %v1168 = vsel %vm1167, %v1159, %v1164
  %v1169 = vrsqrt.pop %v1158
  %v1170 = vmul.f32 %v1169, %v1158
  %v1171 = vmul.f32 %v1170, %v1169
  %v1172 = vmul.f32 0.5, %v1171
  %v1173 = vsub.f32 1.5, %v1172
  %v1174 = vmul.f32 %v1169, %v1173
  %vm1175 = vweird.f32 %v1158
  %vm1176 = vweird.f32 %v1169
  %vm1177 = vmor %vm1175, %vm1176
  %v1178 = vsel %vm1177, %v1169, %v1174
  %v1179 = vmul.f32 %v1145, %v1168
  %v1180 = vmul.f32 %v1146, %v1178
  %v1182 = vperm.slane %v1134, 0
  %v1184 = vmul.f32 %v1179, %v1182
  %v1185 = vmul.f32 %v1180, %v1182
  %v1187 = vperm.slane %v1136, 0
  %v1189 = vadd.f32 %v1184, %v1187
  %v1190 = vadd.f32 %v1185, %v1187
  %s1191 = scalar_lea.vmem %s8, 64
  %v1192 = vld [vmem:[%s1191] sm:$0xff]
  %v1193 = vld [vmem:[%s1191 + $0x8] sm:$0xff]
  %v1194 = vld [vmem:[%s1191 + $0x10] sm:$0xff]
  %v1195 = vld [vmem:[%s1191 + $0x18] sm:$0xff]
  %v1196 = vld [vmem:[%s1191 + $0x20] sm:$0xff]
  %v1197 = vld [vmem:[%s1191 + $0x28] sm:$0xff]
  %v1198 = vld [vmem:[%s1191 + $0x30] sm:$0xff]
  %v1199 = vld [vmem:[%s1191 + $0x38] sm:$0xff]
  %s1200 = scalar_lea.vmem %s9, 1
  %v1201 = vld [vmem:[%s1200] sm:$0x1]
  %v1203 = vperm.slane %v1201, 0
  %v1206 = vsel %vm477, %v1189, 0
  %v1209 = vsel %vm477, %v1190, 0
  %1211 = vmatpush.msra.mxu0 0.0
  %1212 = vmatpush.msra.mxu0 0.0
  %1213 = vmatpush.msra.mxu0 0.0
  %1214 = vmatpush.msra.mxu0 0.0
  %1215 = vmatpush.msra.mxu0 0.0
  %1216 = vmatpush.msra.mxu0 0.0
  %1217 = vmatpush.msra.mxu0 0.0
  %1218 = vmatpush.msra.mxu0 0.0
  %1219 = vmatpush.msra.mxu0 %v1199
  %1220 = vmatpush.msra.mxu0 %v1198
  %1221 = vmatpush.msra.mxu0 %v1197
  %1222 = vmatpush.msra.mxu0 %v1196
  %1223 = vmatpush.msra.mxu0 %v1195
  %1224 = vmatpush.msra.mxu0 %v1194
  %1225 = vmatpush.msra.mxu0 %v1193
  %1226 = vmatpush.msra.mxu0 %v1192
  %1227 = vmatmul.f32.gmra.mxu0 %v1206
  %v1228 = vpop.f32.mrf.mxu0
  %v1229 = vadd.f32 %v1203, %v1228
  %1230 = vmatmul.f32.gmra.mxu0 %v1209
  %v1231 = vpop.f32.mrf.mxu0
  %v1232 = vadd.f32 %v1203, %v1231
  %1233 = vdwg.mxu0
  %v1234 = vmax.f32 %v1229, 0.0
  %v1235 = vmax.f32 %v1232, 0.0
  %s1236 = scalar_lea.vmem %s10, 128
  %v1237 = vld [vmem:[%s1236] sm:$0xff]
  %v1238 = vld [vmem:[%s1236 + $0x8] sm:$0xff]
  %v1239 = vld [vmem:[%s1236 + $0x10] sm:$0xff]
  %v1240 = vld [vmem:[%s1236 + $0x18] sm:$0xff]
  %v1241 = vld [vmem:[%s1236 + $0x20] sm:$0xff]
  %v1242 = vld [vmem:[%s1236 + $0x28] sm:$0xff]
  %v1243 = vld [vmem:[%s1236 + $0x30] sm:$0xff]
  %v1244 = vld [vmem:[%s1236 + $0x38] sm:$0xff]
  %v1245 = vld [vmem:[%s1236 + $0x40] sm:$0xff]
  %v1246 = vld [vmem:[%s1236 + $0x48] sm:$0xff]
  %v1247 = vld [vmem:[%s1236 + $0x50] sm:$0xff]
  %v1248 = vld [vmem:[%s1236 + $0x58] sm:$0xff]
  %v1249 = vld [vmem:[%s1236 + $0x60] sm:$0xff]
  %v1250 = vld [vmem:[%s1236 + $0x68] sm:$0xff]
  %v1251 = vld [vmem:[%s1236 + $0x70] sm:$0xff]
  %v1252 = vld [vmem:[%s1236 + $0x78] sm:$0xff]
  %s1253 = scalar_lea.vmem %s11, 1
  %v1254 = vld [vmem:[%s1253] sm:$0x1]
  %v1256 = vperm.slane %v1254, 0
  %1258 = vmatpush.msra.mxu0 %v1252
  %1259 = vmatpush.msra.mxu0 %v1251
  %1260 = vmatpush.msra.mxu0 %v1250
  %1261 = vmatpush.msra.mxu0 %v1249
  %1262 = vmatpush.msra.mxu0 %v1248
  %1263 = vmatpush.msra.mxu0 %v1247
  %1264 = vmatpush.msra.mxu0 %v1246
  %1265 = vmatpush.msra.mxu0 %v1245
  %1266 = vmatpush.msra.mxu0 %v1244
  %1267 = vmatpush.msra.mxu0 %v1243
  %1268 = vmatpush.msra.mxu0 %v1242
  %1269 = vmatpush.msra.mxu0 %v1241
  %1270 = vmatpush.msra.mxu0 %v1240
  %1271 = vmatpush.msra.mxu0 %v1239
  %1272 = vmatpush.msra.mxu0 %v1238
  %1273 = vmatpush.msra.mxu0 %v1237
  %1274 = vmatmul.f32.gmra.mxu0 %v1234
  %v1275 = vpop.f32.mrf.mxu0
  %v1276 = vadd.f32 %v1256, %v1275
  %1277 = vmatmul.f32.gmra.mxu0 %v1235
  %v1278 = vpop.f32.mrf.mxu0
  %v1279 = vadd.f32 %v1256, %v1278
  %1280 = vdwg.mxu0
  %v1281 = vadd.f32 %v1189, %v1276
  %v1282 = vadd.f32 %v1190, %v1279
  %s1283 = scalar_lea.vmem %s14, 1
  %v1284 = vld [vmem:[%s1283] sm:$0x1]
  %s1285 = scalar_lea.vmem %s15, 1
  %v1286 = vld [vmem:[%s1285] sm:$0x1]
  %v1287 = vsel %vm477, %v1281, 0.0
  %1288 = vadd.xlane.f32.xlu0 %v1287
  %v1289 = vpop.xlane.xlu0 %1288
  %v1290 = vsel %vm477, %v1282, 0.0
  %1291 = vadd.xlane.f32.xlu0 %v1290
  %v1292 = vpop.xlane.xlu0 %1291
  %v1293 = vmul.f32 %v1289, %v698
  %v1294 = vmul.f32 %v1292, %v698
  %v1295 = vsub.f32 %v1281, %v1293
  %v1296 = vsub.f32 %v1282, %v1294
  %v1297 = vmul.f32 %v1295, %v1295
  %v1298 = vmul.f32 %v1296, %v1296
  %v1299 = vsel %vm477, %v1297, 0.0
  %1300 = vadd.xlane.f32.xlu0 %v1299
  %v1301 = vpop.xlane.xlu0 %1300
  %v1302 = vsel %vm477, %v1298, 0.0
  %1303 = vadd.xlane.f32.xlu0 %v1302
  %v1304 = vpop.xlane.xlu0 %1303
  %v1305 = vmul.f32 %v1301, %v698
  %v1306 = vmul.f32 %v1304, %v698
  %v1307 = vadd.f32 %v1305, 1e-05
  %v1308 = vadd.f32 %v1306, 1e-05
  %v1309 = vrsqrt.pop %v1307
  %v1310 = vmul.f32 %v1309, %v1307
  %v1311 = vmul.f32 %v1310, %v1309
  %v1312 = vmul.f32 0.5, %v1311
  %v1313 = vsub.f32 1.5, %v1312
  %v1314 = vmul.f32 %v1309, %v1313
  %vm1315 = vweird.f32 %v1307
  %vm1316 = vweird.f32 %v1309
  %vm1317 = vmor %vm1315, %vm1316
  %v1318 = vsel %vm1317, %v1309, %v1314
  %v1319 = vrsqrt.pop %v1308
  %v1320 = vmul.f32 %v1319, %v1308
  %v1321 = vmul.f32 %v1320, %v1319
  %v1322 = vmul.f32 0.5, %v1321
  %v1323 = vsub.f32 1.5, %v1322
  %v1324 = vmul.f32 %v1319, %v1323
  %vm1325 = vweird.f32 %v1308
  %vm1326 = vweird.f32 %v1319
  %vm1327 = vmor %vm1325, %vm1326
  %v1328 = vsel %vm1327, %v1319, %v1324
  %v1329 = vmul.f32 %v1295, %v1318
  %v1330 = vmul.f32 %v1296, %v1328
  %v1332 = vperm.slane %v1284, 0
  %v1334 = vmul.f32 %v1329, %v1332
  %v1335 = vmul.f32 %v1330, %v1332
  %v1337 = vperm.slane %v1286, 0
  %v1339 = vadd.f32 %v1334, %v1337
  %v1340 = vadd.f32 %v1335, %v1337
  %v1341 = vld [vmem:[%s16] sm:$0xff]
  %v1342 = vld [vmem:[%s16 + $0x8] sm:$0xff]
  %v1343 = vld [vmem:[%s16 + $0x10] sm:$0xff]
  %v1344 = vld [vmem:[%s16 + $0x18] sm:$0xff]
  %v1345 = vld [vmem:[%s16 + $0x20] sm:$0xff]
  %v1346 = vld [vmem:[%s16 + $0x28] sm:$0xff]
  %v1347 = vld [vmem:[%s16 + $0x30] sm:$0xff]
  %v1348 = vld [vmem:[%s16 + $0x38] sm:$0xff]
  %v1349 = vld [vmem:[%s16 + $0x40] sm:$0xff]
  %v1350 = vld [vmem:[%s16 + $0x48] sm:$0xff]
  %v1351 = vld [vmem:[%s16 + $0x50] sm:$0xff]
  %v1352 = vld [vmem:[%s16 + $0x58] sm:$0xff]
  %v1353 = vld [vmem:[%s16 + $0x60] sm:$0xff]
  %v1354 = vld [vmem:[%s16 + $0x68] sm:$0xff]
  %v1355 = vld [vmem:[%s16 + $0x70] sm:$0xff]
  %v1356 = vld [vmem:[%s16 + $0x78] sm:$0xff]
  %v1357 = vld [vmem:[%s16 + $0x80] sm:$0xff]
  %v1358 = vld [vmem:[%s16 + $0x88] sm:$0xff]
  %v1359 = vld [vmem:[%s16 + $0x90] sm:$0xff]
  %v1360 = vld [vmem:[%s16 + $0x98] sm:$0xff]
  %v1361 = vld [vmem:[%s16 + $0xa0] sm:$0xff]
  %v1362 = vld [vmem:[%s16 + $0xa8] sm:$0xff]
  %v1363 = vld [vmem:[%s16 + $0xb0] sm:$0xff]
  %v1364 = vld [vmem:[%s16 + $0xb8] sm:$0xff]
  %v1365 = vld [vmem:[%s16 + $0xc0] sm:$0xff]
  %v1366 = vld [vmem:[%s16 + $0xc8] sm:$0xff]
  %v1367 = vld [vmem:[%s16 + $0xd0] sm:$0xff]
  %v1368 = vld [vmem:[%s16 + $0xd8] sm:$0xff]
  %v1369 = vld [vmem:[%s16 + $0xe0] sm:$0xff]
  %v1370 = vld [vmem:[%s16 + $0xe8] sm:$0xff]
  %v1371 = vld [vmem:[%s16 + $0xf0] sm:$0xff]
  %v1372 = vld [vmem:[%s16 + $0xf8] sm:$0xff]
  %v1373 = vld [vmem:[%s16 + $0x100] sm:$0xff]
  %v1374 = vld [vmem:[%s16 + $0x108] sm:$0xff]
  %v1375 = vld [vmem:[%s16 + $0x110] sm:$0xff]
  %v1376 = vld [vmem:[%s16 + $0x118] sm:$0xff]
  %v1377 = vld [vmem:[%s16 + $0x120] sm:$0xff]
  %v1378 = vld [vmem:[%s16 + $0x128] sm:$0xff]
  %v1379 = vld [vmem:[%s16 + $0x130] sm:$0xff]
  %v1380 = vld [vmem:[%s16 + $0x138] sm:$0xff]
  %v1381 = vld [vmem:[%s16 + $0x140] sm:$0xff]
  %v1382 = vld [vmem:[%s16 + $0x148] sm:$0xff]
  %v1383 = vld [vmem:[%s16 + $0x150] sm:$0xff]
  %v1384 = vld [vmem:[%s16 + $0x158] sm:$0xff]
  %v1385 = vld [vmem:[%s16 + $0x160] sm:$0xff]
  %v1386 = vld [vmem:[%s16 + $0x168] sm:$0xff]
  %v1387 = vld [vmem:[%s16 + $0x170] sm:$0xff]
  %v1388 = vld [vmem:[%s16 + $0x178] sm:$0xff]
  %v1389 = vld [vmem:[%s16 + $0x180] sm:$0xff]
  %v1390 = vld [vmem:[%s16 + $0x188] sm:$0xff]
  %v1391 = vld [vmem:[%s16 + $0x190] sm:$0xff]
  %v1392 = vld [vmem:[%s16 + $0x198] sm:$0xff]
  %v1393 = vld [vmem:[%s16 + $0x1a0] sm:$0xff]
  %v1394 = vld [vmem:[%s16 + $0x1a8] sm:$0xff]
  %v1395 = vld [vmem:[%s16 + $0x1b0] sm:$0xff]
  %v1396 = vld [vmem:[%s16 + $0x1b8] sm:$0xff]
  %v1397 = vld [vmem:[%s16 + $0x1c0] sm:$0xff]
  %v1398 = vld [vmem:[%s16 + $0x1c8] sm:$0xff]
  %v1399 = vld [vmem:[%s16 + $0x1d0] sm:$0xff]
  %v1400 = vld [vmem:[%s16 + $0x1d8] sm:$0xff]
  %v1401 = vld [vmem:[%s16 + $0x1e0] sm:$0xff]
  %v1402 = vld [vmem:[%s16 + $0x1e8] sm:$0xff]
  %v1403 = vld [vmem:[%s16 + $0x1f0] sm:$0xff]
  %v1404 = vld [vmem:[%s16 + $0x1f8] sm:$0xff]
  %v1405 = vld [vmem:[%s17] sm:$0xff]
  %v1407 = vperm.slane %v1405, 0
  %v1408 = vperm.slane %v1405, 1
  %v1409 = vperm.slane %v1405, 2
  %v1410 = vperm.slane %v1405, 3
  %v1411 = vperm.slane %v1405, 4
  %v1412 = vperm.slane %v1405, 5
  %v1413 = vperm.slane %v1405, 6
  %v1414 = vperm.slane %v1405, 7
  %v1424 = vsel %vm477, %v1339, 0
  %v1427 = vsel %vm477, %v1340, 0
  %1429 = vmatpush.msra.mxu0 0.0
  %1430 = vmatpush.msra.mxu0 0.0
  %1431 = vmatpush.msra.mxu0 0.0
  %1432 = vmatpush.msra.mxu0 0.0
  %1433 = vmatpush.msra.mxu0 0.0
  %1434 = vmatpush.msra.mxu0 0.0
  %1435 = vmatpush.msra.mxu0 0.0
  %1436 = vmatpush.msra.mxu0 0.0
  %1437 = vmatpush.msra.mxu0 %v1397
  %1438 = vmatpush.msra.mxu0 %v1389
  %1439 = vmatpush.msra.mxu0 %v1381
  %1440 = vmatpush.msra.mxu0 %v1373
  %1441 = vmatpush.msra.mxu0 %v1365
  %1442 = vmatpush.msra.mxu0 %v1357
  %1443 = vmatpush.msra.mxu0 %v1349
  %1444 = vmatpush.msra.mxu0 %v1341
  %1445 = vmatmul.f32.gmra.mxu0 %v1424
  %v1446 = vpop.f32.mrf.mxu0
  %v1447 = vadd.f32 %v1407, %v1446
  %1448 = vmatmul.f32.gmra.mxu0 %v1427
  %v1449 = vpop.f32.mrf.mxu0
  %v1450 = vadd.f32 %v1407, %v1449
  %1451 = vdwg.mxu0
  %1452 = vmatpush.msra.mxu0 0.0
  %1453 = vmatpush.msra.mxu0 0.0
  %1454 = vmatpush.msra.mxu0 0.0
  %1455 = vmatpush.msra.mxu0 0.0
  %1456 = vmatpush.msra.mxu0 0.0
  %1457 = vmatpush.msra.mxu0 0.0
  %1458 = vmatpush.msra.mxu0 0.0
  %1459 = vmatpush.msra.mxu0 0.0
  %1460 = vmatpush.msra.mxu0 %v1398
  %1461 = vmatpush.msra.mxu0 %v1390
  %1462 = vmatpush.msra.mxu0 %v1382
  %1463 = vmatpush.msra.mxu0 %v1374
  %1464 = vmatpush.msra.mxu0 %v1366
  %1465 = vmatpush.msra.mxu0 %v1358
  %1466 = vmatpush.msra.mxu0 %v1350
  %1467 = vmatpush.msra.mxu0 %v1342
  %1468 = vmatmul.f32.gmra.mxu0 %v1424
  %v1469 = vpop.f32.mrf.mxu0
  %v1470 = vadd.f32 %v1408, %v1469
  %1471 = vmatmul.f32.gmra.mxu0 %v1427
  %v1472 = vpop.f32.mrf.mxu0
  %v1473 = vadd.f32 %v1408, %v1472
  %1474 = vdwg.mxu0
  %1475 = vmatpush.msra.mxu0 0.0
  %1476 = vmatpush.msra.mxu0 0.0
  %1477 = vmatpush.msra.mxu0 0.0
  %1478 = vmatpush.msra.mxu0 0.0
  %1479 = vmatpush.msra.mxu0 0.0
  %1480 = vmatpush.msra.mxu0 0.0
  %1481 = vmatpush.msra.mxu0 0.0
  %1482 = vmatpush.msra.mxu0 0.0
  %1483 = vmatpush.msra.mxu0 %v1399
  %1484 = vmatpush.msra.mxu0 %v1391
  %1485 = vmatpush.msra.mxu0 %v1383
  %1486 = vmatpush.msra.mxu0 %v1375
  %1487 = vmatpush.msra.mxu0 %v1367
  %1488 = vmatpush.msra.mxu0 %v1359
  %1489 = vmatpush.msra.mxu0 %v1351
  %1490 = vmatpush.msra.mxu0 %v1343
  %1491 = vmatmul.f32.gmra.mxu0 %v1424
  %v1492 = vpop.f32.mrf.mxu0
  %v1493 = vadd.f32 %v1409, %v1492
  %1494 = vmatmul.f32.gmra.mxu0 %v1427
  %v1495 = vpop.f32.mrf.mxu0
  %v1496 = vadd.f32 %v1409, %v1495
  %1497 = vdwg.mxu0
  %1498 = vmatpush.msra.mxu0 0.0
  %1499 = vmatpush.msra.mxu0 0.0
  %1500 = vmatpush.msra.mxu0 0.0
  %1501 = vmatpush.msra.mxu0 0.0
  %1502 = vmatpush.msra.mxu0 0.0
  %1503 = vmatpush.msra.mxu0 0.0
  %1504 = vmatpush.msra.mxu0 0.0
  %1505 = vmatpush.msra.mxu0 0.0
  %1506 = vmatpush.msra.mxu0 %v1400
  %1507 = vmatpush.msra.mxu0 %v1392
  %1508 = vmatpush.msra.mxu0 %v1384
  %1509 = vmatpush.msra.mxu0 %v1376
  %1510 = vmatpush.msra.mxu0 %v1368
  %1511 = vmatpush.msra.mxu0 %v1360
  %1512 = vmatpush.msra.mxu0 %v1352
  %1513 = vmatpush.msra.mxu0 %v1344
  %1514 = vmatmul.f32.gmra.mxu0 %v1424
  %v1515 = vpop.f32.mrf.mxu0
  %v1516 = vadd.f32 %v1410, %v1515
  %1517 = vmatmul.f32.gmra.mxu0 %v1427
  %v1518 = vpop.f32.mrf.mxu0
  %v1519 = vadd.f32 %v1410, %v1518
  %1520 = vdwg.mxu0
  %1521 = vmatpush.msra.mxu0 0.0
  %1522 = vmatpush.msra.mxu0 0.0
  %1523 = vmatpush.msra.mxu0 0.0
  %1524 = vmatpush.msra.mxu0 0.0
  %1525 = vmatpush.msra.mxu0 0.0
  %1526 = vmatpush.msra.mxu0 0.0
  %1527 = vmatpush.msra.mxu0 0.0
  %1528 = vmatpush.msra.mxu0 0.0
  %1529 = vmatpush.msra.mxu0 %v1401
  %1530 = vmatpush.msra.mxu0 %v1393
  %1531 = vmatpush.msra.mxu0 %v1385
  %1532 = vmatpush.msra.mxu0 %v1377
  %1533 = vmatpush.msra.mxu0 %v1369
  %1534 = vmatpush.msra.mxu0 %v1361
  %1535 = vmatpush.msra.mxu0 %v1353
  %1536 = vmatpush.msra.mxu0 %v1345
  %1537 = vmatmul.f32.gmra.mxu0 %v1424
  %v1538 = vpop.f32.mrf.mxu0
  %v1539 = vadd.f32 %v1411, %v1538
  %1540 = vmatmul.f32.gmra.mxu0 %v1427
  %v1541 = vpop.f32.mrf.mxu0
  %v1542 = vadd.f32 %v1411, %v1541
  %1543 = vdwg.mxu0
  %1544 = vmatpush.msra.mxu0 0.0
  %1545 = vmatpush.msra.mxu0 0.0
  %1546 = vmatpush.msra.mxu0 0.0
  %1547 = vmatpush.msra.mxu0 0.0
  %1548 = vmatpush.msra.mxu0 0.0
  %1549 = vmatpush.msra.mxu0 0.0
  %1550 = vmatpush.msra.mxu0 0.0
  %1551 = vmatpush.msra.mxu0 0.0
  %1552 = vmatpush.msra.mxu0 %v1402
  %1553 = vmatpush.msra.mxu0 %v1394
  %1554 = vmatpush.msra.mxu0 %v1386
  %1555 = vmatpush.msra.mxu0 %v1378
  %1556 = vmatpush.msra.mxu0 %v1370
  %1557 = vmatpush.msra.mxu0 %v1362
  %1558 = vmatpush.msra.mxu0 %v1354
  %1559 = vmatpush.msra.mxu0 %v1346
  %1560 = vmatmul.f32.gmra.mxu0 %v1424
  %v1561 = vpop.f32.mrf.mxu0
  %v1562 = vadd.f32 %v1412, %v1561
  %1563 = vmatmul.f32.gmra.mxu0 %v1427
  %v1564 = vpop.f32.mrf.mxu0
  %v1565 = vadd.f32 %v1412, %v1564
  %1566 = vdwg.mxu0
  %1567 = vmatpush.msra.mxu0 0.0
  %1568 = vmatpush.msra.mxu0 0.0
  %1569 = vmatpush.msra.mxu0 0.0
  %1570 = vmatpush.msra.mxu0 0.0
  %1571 = vmatpush.msra.mxu0 0.0
  %1572 = vmatpush.msra.mxu0 0.0
  %1573 = vmatpush.msra.mxu0 0.0
  %1574 = vmatpush.msra.mxu0 0.0
  %1575 = vmatpush.msra.mxu0 %v1403
  %1576 = vmatpush.msra.mxu0 %v1395
  %1577 = vmatpush.msra.mxu0 %v1387
  %1578 = vmatpush.msra.mxu0 %v1379
  %1579 = vmatpush.msra.mxu0 %v1371
  %1580 = vmatpush.msra.mxu0 %v1363
  %1581 = vmatpush.msra.mxu0 %v1355
  %1582 = vmatpush.msra.mxu0 %v1347
  %1583 = vmatmul.f32.gmra.mxu0 %v1424
  %v1584 = vpop.f32.mrf.mxu0
  %v1585 = vadd.f32 %v1413, %v1584
  %1586 = vmatmul.f32.gmra.mxu0 %v1427
  %v1587 = vpop.f32.mrf.mxu0
  %v1588 = vadd.f32 %v1413, %v1587
  %1589 = vdwg.mxu0
  %1590 = vmatpush.msra.mxu0 0.0
  %1591 = vmatpush.msra.mxu0 0.0
  %1592 = vmatpush.msra.mxu0 0.0
  %1593 = vmatpush.msra.mxu0 0.0
  %1594 = vmatpush.msra.mxu0 0.0
  %1595 = vmatpush.msra.mxu0 0.0
  %1596 = vmatpush.msra.mxu0 0.0
  %1597 = vmatpush.msra.mxu0 0.0
  %1598 = vmatpush.msra.mxu0 %v1404
  %1599 = vmatpush.msra.mxu0 %v1396
  %1600 = vmatpush.msra.mxu0 %v1388
  %1601 = vmatpush.msra.mxu0 %v1380
  %1602 = vmatpush.msra.mxu0 %v1372
  %1603 = vmatpush.msra.mxu0 %v1364
  %1604 = vmatpush.msra.mxu0 %v1356
  %1605 = vmatpush.msra.mxu0 %v1348
  %1606 = vmatmul.f32.gmra.mxu0 %v1424
  %v1607 = vpop.f32.mrf.mxu0
  %v1608 = vadd.f32 %v1414, %v1607
  %1609 = vmatmul.f32.gmra.mxu0 %v1427
  %v1610 = vpop.f32.mrf.mxu0
  %v1611 = vadd.f32 %v1414, %v1610
  %1612 = vdwg.mxu0
  %1613 = vst [vmem:[%s18] sm:$0xff] %v1447
  %1614 = vst [vmem:[%s18 + $0x8] sm:$0xff] %v1470
  %1615 = vst [vmem:[%s18 + $0x10] sm:$0xff] %v1493
  %1616 = vst [vmem:[%s18 + $0x18] sm:$0xff] %v1516
  %1617 = vst [vmem:[%s18 + $0x20] sm:$0xff] %v1539
  %1618 = vst [vmem:[%s18 + $0x28] sm:$0xff] %v1562
  %1619 = vst [vmem:[%s18 + $0x30] sm:$0xff] %v1585
  %1620 = vst [vmem:[%s18 + $0x38] sm:$0xff] %v1608
  %1621 = vst [vmem:[%s18 + $0x40] sm:$0xff] %v1450
  %1622 = vst [vmem:[%s18 + $0x48] sm:$0xff] %v1473
  %1623 = vst [vmem:[%s18 + $0x50] sm:$0xff] %v1496
  %1624 = vst [vmem:[%s18 + $0x58] sm:$0xff] %v1519
  %1625 = vst [vmem:[%s18 + $0x60] sm:$0xff] %v1542
  %1626 = vst [vmem:[%s18 + $0x68] sm:$0xff] %v1565
  %1627 = vst [vmem:[%s18 + $0x70] sm:$0xff] %v1588
  %1628 = vst [vmem:[%s18 + $0x78] sm:$0xff] %v1611
  // Predicated region
  $region74: #{bert_mini_forward.1} parent=0 // pred_check
    _
  $region75: #{bert_mini_forward.1} parent=0 // pred_check_branch
    %1630 = sbr.rel (0) target = $region77
  $region76: #{bert_mini_forward.1} parent=0 // pred_region
    _
  $region77: #{bert_mini_forward.1} parent=0 // pred_fallthru
    _
  // Predicated region
  $region78: #{bert_mini_forward.1} parent=0 // pred_check
    _
  $region79: #{bert_mini_forward.1} parent=0 // pred_check_branch
    %1632 = sbr.rel (0) target = $region81
  $region80: #{bert_mini_forward.1} parent=0 // pred_region
    _
  $region81: #{bert_mini_forward.1} parent=0 // pred_fallthru
    _

</llo_original>
